<compile_context>
chip_gen: v6e
topology: v6e:2x2x1
jax: 0.10.0
libtpu: 0.0.40
codegen_flags: <defaults>
</compile_context>

<pallas_src>
import jax
import jax.numpy as jnp
from jax.experimental import pallas as pl
from jax.experimental.pallas import tpu as pltpu


def fused_generator_forward(x_nhwc, w_first, w_feats, w_final, *, stride):
    """Fused KernelGAN-Generator conv stack in a single Pallas kernel.

    x_nhwc : (N, H, W, 1) float32 (N = image channels acting as batch after swap_axis).
    w_first: (K0, K0, 1, C) HWIO, valid padding, no bias.
    w_feats: list of (K, K, C, C) HWIO feature-block weights.
    w_final: (1, 1, C, 1) HWIO, stride `stride`.
    Returns (N, OH, OW) float32.
    """
    N, H, W, cin = x_nhwc.shape
    assert cin == 1, "first conv layer expects a single input channel"
    K0 = int(w_first.shape[0])
    chan = int(w_first.shape[3])
    # TODO(synk): general K>1 strided final conv is not needed by this module.
    assert w_final.shape[0] == 1 and w_final.shape[1] == 1, "final layer must be 1x1"

    struct = (K0,) + tuple(int(w.shape[0]) for w in w_feats) + (1,)
    n_layers = len(struct)

    # Static per-layer spatial sizes (valid padding).
    sizes = [(H, W)]
    for i, K in enumerate(struct):
        s = stride if i == n_layers - 1 else 1
        ih, iw = sizes[-1]
        sizes.append(((ih - K) // s + 1, (iw - K) // s + 1))
    IHf, IWf = sizes[-2]          # spatial size entering the final 1x1 layer
    OH, OW = sizes[-1]            # final output spatial size
    if stride > 1:
        assert IHf == OH * stride and IWf == OW * stride, (
            "strided 1x1 path assumes the pre-final spatial size is a multiple of the stride")

    # Pre-flatten the weights in the wrapper (im2col column order = (kh, kw, cin),
    # which matches a straight reshape of the HWIO layout).
    w_first_flat = w_first.reshape(K0 * K0, chan)
    w_feats_flat = [w.reshape(int(w.shape[0]) * int(w.shape[1]) * chan, chan)
                    for w in w_feats]
    w_final_flat = w_final.reshape(1, chan)

    def kernel(x_ref, *refs):
        w_refs = refs[:n_layers]
        o_ref = refs[n_layers]

        x = x_ref[...]                                    # (N, H, W, 1) f32

        # ---- first layer (Cin == 1): VPU broadcast-MAC over the K*K taps ----
        K = struct[0]
        H1, W1 = sizes[1]
        w1 = w_refs[0][...]                               # (K*K, chan)
        h = jnp.zeros((N, H1, W1, chan), jnp.float32)
        for kh in range(K):
            for kw in range(K):
                win = jax.lax.slice(x, (0, kh, kw, 0), (N, kh + H1, kw + W1, 1))
                h = h + win * w1[kh * K + kw]             # (N,H1,W1,1) * (chan,)

        # ---- feature layers: im2col + ONE MXU matmul per layer ----
        for li in range(1, n_layers - 1):
            K = struct[li]
            OHl, OWl = sizes[li + 1]
            w = w_refs[li][...]                           # (K*K*chan, chan)
            cols = jnp.concatenate(
                [jax.lax.slice(h, (0, kh, kw, 0), (N, kh + OHl, kw + OWl, chan))
                 for kh in range(K) for kw in range(K)],
                axis=-1)                                  # (N, OHl, OWl, K*K*chan)
            h = jnp.dot(cols.reshape(N * OHl * OWl, K * K * chan), w,
                        preferred_element_type=jnp.float32)
            h = h.reshape(N, OHl, OWl, chan)

        # ---- final layer: 1x1, stride s, Cout == 1 ----
        # Strided spatial subsample on data already resident in vregs, then a
        # channel reduction on the VPU/XLU.
        if stride > 1:
            h = h.reshape(N * OH, stride, IWf, chan)[:, 0]      # rows 0, s, 2s, ...
            h = h.reshape(N * OH, OW, stride, chan)[:, :, 0]    # cols 0, s, 2s, ...
        else:
            h = h.reshape(N * OH, OW, chan)
        wf = w_refs[n_layers - 1][0]                      # (chan,)
        y = jnp.sum(h * wf, axis=-1)                      # (N*OH, OW)
        o_ref[...] = y.reshape(N, OH, OW).astype(o_ref.dtype)

    vmem = pl.BlockSpec(memory_space=pltpu.MemorySpace.VMEM)
    return pl.pallas_call(
        kernel,
        out_shape=jax.ShapeDtypeStruct((N, OH, OW), jnp.float32),
        in_specs=[vmem] * (1 + n_layers),
        out_specs=vmem,
    )(x_nhwc, w_first_flat, *w_feats_flat, w_final_flat)


class GeneratorPallas:
    """Mirror of kernelganG.Generator (forward pass), Pallas TPU backend."""

    def __init__(self, key, G_structure=(3, 3, 1), G_chan=8,
                 scale_factor=0.5, input_crop_size=16):
        self.struct = tuple(G_structure)
        self.G_chan = G_chan
        self.stride = int(1 / scale_factor)

        keys = jax.random.split(key, len(self.struct))

        def init_w(k, K, cin, cout):
            # PyTorch conv weight is (Cout, Cin, K, K), kaiming-uniform; we keep
            # HWIO layout with the same fan-in-based bound.
            fan_in = cin * K * K
            bound = 1.0 / (fan_in ** 0.5)
            return jax.random.uniform(k, (K, K, cin, cout), jnp.float32,
                                      minval=-bound, maxval=bound)

        self.w_first = init_w(keys[0], self.struct[0], 1, G_chan)
        self.w_feat = [init_w(keys[i], self.struct[i], G_chan, G_chan)
                       for i in range(1, len(self.struct) - 1)]
        self.w_final = init_w(keys[-1], self.struct[-1], G_chan, 1)

        # Jit once so the __init__ shape probe and later calls reuse the trace
        # (one compile per distinct input shape).
        self._forward = jax.jit(self._forward_impl)

        # Mimic the torch __init__ shape probe.
        probe = jnp.ones((1, 1, input_crop_size, input_crop_size), jnp.float32)
        self.output_size = int(self._forward(probe).shape[-1])
        self.forward_shave = int(input_crop_size * scale_factor) - self.output_size

    def __call__(self, x_nchw):
        return self._forward(x_nchw)

    def _forward_impl(self, x_nchw):
        # swap_axis: swap batch and channel (image channels become the batch).
        x = jnp.swapaxes(x_nchw, 0, 1)          # (C, B, H, W); B must be 1
        assert x.shape[1] == 1, "Generator expects a single-sample NCHW input"
        x = jnp.transpose(x, (0, 2, 3, 1))      # NCHW -> NHWC (channel dim = 1)
        y = fused_generator_forward(x, self.w_first, self.w_feat, self.w_final,
                                    stride=self.stride)       # (N, OH, OW)
        y = y[:, None, :, :]                    # -> NCHW with C = 1
        return jnp.swapaxes(y, 0, 1)            # swap_axis back -> (1, N, OH, OW)


def _conv_ref(x, w, stride):
    return jax.lax.conv_general_dilated(
        x, w, (stride, stride), "VALID",
        dimension_numbers=("NHWC", "HWIO", "NHWC"))


if __name__ == "__main__":
    key = jax.random.PRNGKey(0)
    k_w, k_x = jax.random.split(key)

    gen = GeneratorPallas(k_w, G_structure=(3, 3, 1), G_chan=8,
                          scale_factor=0.5, input_crop_size=16)

    # Module expects NCHW with batch == 1; image channels act as batch after swap_axis.
    x = jax.random.normal(k_x, (1, 3, 16, 16), jnp.float32)

    out = jax.block_until_ready(gen(x))

    # Pure-JAX reference for correctness.
    def ref_forward(x_nchw):
        y = jnp.swapaxes(x_nchw, 0, 1)
        y = jnp.transpose(y, (0, 2, 3, 1))
        y = _conv_ref(y, gen.w_first, 1)
        for w in gen.w_feat:
            y = _conv_ref(y, w, 1)
        y = _conv_ref(y, gen.w_final, gen.stride)
        y = jnp.transpose(y, (0, 3, 1, 2))
        return jnp.swapaxes(y, 0, 1)

    ref = ref_forward(x)
    assert out.shape == ref.shape == (1, 3, 6, 6), (out.shape, ref.shape)
    assert jnp.allclose(out, ref, atol=1e-4, rtol=1e-4)
    assert gen.output_size == 6 and gen.forward_shave == 2

    print("KERNEL_OK")
</pallas_src>

<mosaic_0001>
module attributes {stable_mosaic.version = 11 : i64} {
  func.func @kernel(%arg0: memref<1x16x16x1xf32, #tpu.memory_space<vmem>>, %arg1: memref<9x8xf32, #tpu.memory_space<vmem>>, %arg2: memref<72x8xf32, #tpu.memory_space<vmem>>, %arg3: memref<1x8xf32, #tpu.memory_space<vmem>>, %arg4: memref<1x6x6xf32, #tpu.memory_space<vmem>>) attributes {dimension_semantics = [], scalar_prefetch = 0 : i64, scratch_operands = 0 : i64, tpu.core_type = #tpu.core_type<tc>} {
    %c0 = arith.constant 0 : index
    %c0_0 = arith.constant 0 : index
    %c0_1 = arith.constant 0 : index
    %c0_2 = arith.constant 0 : index
    %0 = vector.load %arg0[%c0, %c0_0, %c0_1, %c0_2] : memref<1x16x16x1xf32, #tpu.memory_space<vmem>>, vector<1x16x16x1xf32>
    %c0_3 = arith.constant 0 : index
    %c0_4 = arith.constant 0 : index
    %1 = vector.load %arg1[%c0_3, %c0_4] : memref<9x8xf32, #tpu.memory_space<vmem>>, vector<9x8xf32>
    %cst = arith.constant 0.000000e+00 : f32
    %2 = vector.broadcast %cst : f32 to vector<1x14x14x8xf32>
    %3 = vector.extract_strided_slice %0 {offsets = [0, 0, 0, 0], sizes = [1, 14, 14, 1], strides = [1, 1, 1, 1]} : vector<1x16x16x1xf32> to vector<1x14x14x1xf32>
    %4 = vector.extract_strided_slice %1 {offsets = [0, 0], sizes = [1, 8], strides = [1, 1]} : vector<9x8xf32> to vector<1x8xf32>
    %5 = vector.shape_cast %4 : vector<1x8xf32> to vector<8xf32>
    %6 = vector.shape_cast %5 : vector<8xf32> to vector<1x1x1x8xf32>
    %7 = vector.broadcast %3 : vector<1x14x14x1xf32> to vector<1x14x14x8xf32>
    %8 = vector.broadcast %6 : vector<1x1x1x8xf32> to vector<1x14x14x8xf32>
    %9 = arith.mulf %7, %8 : vector<1x14x14x8xf32>
    %10 = arith.addf %2, %9 : vector<1x14x14x8xf32>
    %11 = vector.extract_strided_slice %0 {offsets = [0, 0, 1, 0], sizes = [1, 14, 14, 1], strides = [1, 1, 1, 1]} : vector<1x16x16x1xf32> to vector<1x14x14x1xf32>
    %12 = vector.extract_strided_slice %1 {offsets = [1, 0], sizes = [1, 8], strides = [1, 1]} : vector<9x8xf32> to vector<1x8xf32>
    %13 = vector.shape_cast %12 : vector<1x8xf32> to vector<8xf32>
    %14 = vector.shape_cast %13 : vector<8xf32> to vector<1x1x1x8xf32>
    %15 = vector.broadcast %11 : vector<1x14x14x1xf32> to vector<1x14x14x8xf32>
    %16 = vector.broadcast %14 : vector<1x1x1x8xf32> to vector<1x14x14x8xf32>
    %17 = arith.mulf %15, %16 : vector<1x14x14x8xf32>
    %18 = arith.addf %10, %17 : vector<1x14x14x8xf32>
    %19 = vector.extract_strided_slice %0 {offsets = [0, 0, 2, 0], sizes = [1, 14, 14, 1], strides = [1, 1, 1, 1]} : vector<1x16x16x1xf32> to vector<1x14x14x1xf32>
    %20 = vector.extract_strided_slice %1 {offsets = [2, 0], sizes = [1, 8], strides = [1, 1]} : vector<9x8xf32> to vector<1x8xf32>
    %21 = vector.shape_cast %20 : vector<1x8xf32> to vector<8xf32>
    %22 = vector.shape_cast %21 : vector<8xf32> to vector<1x1x1x8xf32>
    %23 = vector.broadcast %19 : vector<1x14x14x1xf32> to vector<1x14x14x8xf32>
    %24 = vector.broadcast %22 : vector<1x1x1x8xf32> to vector<1x14x14x8xf32>
    %25 = arith.mulf %23, %24 : vector<1x14x14x8xf32>
    %26 = arith.addf %18, %25 : vector<1x14x14x8xf32>
    %27 = vector.extract_strided_slice %0 {offsets = [0, 1, 0, 0], sizes = [1, 14, 14, 1], strides = [1, 1, 1, 1]} : vector<1x16x16x1xf32> to vector<1x14x14x1xf32>
    %28 = vector.extract_strided_slice %1 {offsets = [3, 0], sizes = [1, 8], strides = [1, 1]} : vector<9x8xf32> to vector<1x8xf32>
    %29 = vector.shape_cast %28 : vector<1x8xf32> to vector<8xf32>
    %30 = vector.shape_cast %29 : vector<8xf32> to vector<1x1x1x8xf32>
    %31 = vector.broadcast %27 : vector<1x14x14x1xf32> to vector<1x14x14x8xf32>
    %32 = vector.broadcast %30 : vector<1x1x1x8xf32> to vector<1x14x14x8xf32>
    %33 = arith.mulf %31, %32 : vector<1x14x14x8xf32>
    %34 = arith.addf %26, %33 : vector<1x14x14x8xf32>
    %35 = vector.extract_strided_slice %0 {offsets = [0, 1, 1, 0], sizes = [1, 14, 14, 1], strides = [1, 1, 1, 1]} : vector<1x16x16x1xf32> to vector<1x14x14x1xf32>
    %36 = vector.extract_strided_slice %1 {offsets = [4, 0], sizes = [1, 8], strides = [1, 1]} : vector<9x8xf32> to vector<1x8xf32>
    %37 = vector.shape_cast %36 : vector<1x8xf32> to vector<8xf32>
    %38 = vector.shape_cast %37 : vector<8xf32> to vector<1x1x1x8xf32>
    %39 = vector.broadcast %35 : vector<1x14x14x1xf32> to vector<1x14x14x8xf32>
    %40 = vector.broadcast %38 : vector<1x1x1x8xf32> to vector<1x14x14x8xf32>
    %41 = arith.mulf %39, %40 : vector<1x14x14x8xf32>
    %42 = arith.addf %34, %41 : vector<1x14x14x8xf32>
    %43 = vector.extract_strided_slice %0 {offsets = [0, 1, 2, 0], sizes = [1, 14, 14, 1], strides = [1, 1, 1, 1]} : vector<1x16x16x1xf32> to vector<1x14x14x1xf32>
    %44 = vector.extract_strided_slice %1 {offsets = [5, 0], sizes = [1, 8], strides = [1, 1]} : vector<9x8xf32> to vector<1x8xf32>
    %45 = vector.shape_cast %44 : vector<1x8xf32> to vector<8xf32>
    %46 = vector.shape_cast %45 : vector<8xf32> to vector<1x1x1x8xf32>
    %47 = vector.broadcast %43 : vector<1x14x14x1xf32> to vector<1x14x14x8xf32>
    %48 = vector.broadcast %46 : vector<1x1x1x8xf32> to vector<1x14x14x8xf32>
    %49 = arith.mulf %47, %48 : vector<1x14x14x8xf32>
    %50 = arith.addf %42, %49 : vector<1x14x14x8xf32>
    %51 = vector.extract_strided_slice %0 {offsets = [0, 2, 0, 0], sizes = [1, 14, 14, 1], strides = [1, 1, 1, 1]} : vector<1x16x16x1xf32> to vector<1x14x14x1xf32>
    %52 = vector.extract_strided_slice %1 {offsets = [6, 0], sizes = [1, 8], strides = [1, 1]} : vector<9x8xf32> to vector<1x8xf32>
    %53 = vector.shape_cast %52 : vector<1x8xf32> to vector<8xf32>
    %54 = vector.shape_cast %53 : vector<8xf32> to vector<1x1x1x8xf32>
    %55 = vector.broadcast %51 : vector<1x14x14x1xf32> to vector<1x14x14x8xf32>
    %56 = vector.broadcast %54 : vector<1x1x1x8xf32> to vector<1x14x14x8xf32>
    %57 = arith.mulf %55, %56 : vector<1x14x14x8xf32>
    %58 = arith.addf %50, %57 : vector<1x14x14x8xf32>
    %59 = vector.extract_strided_slice %0 {offsets = [0, 2, 1, 0], sizes = [1, 14, 14, 1], strides = [1, 1, 1, 1]} : vector<1x16x16x1xf32> to vector<1x14x14x1xf32>
    %60 = vector.extract_strided_slice %1 {offsets = [7, 0], sizes = [1, 8], strides = [1, 1]} : vector<9x8xf32> to vector<1x8xf32>
    %61 = vector.shape_cast %60 : vector<1x8xf32> to vector<8xf32>
    %62 = vector.shape_cast %61 : vector<8xf32> to vector<1x1x1x8xf32>
    %63 = vector.broadcast %59 : vector<1x14x14x1xf32> to vector<1x14x14x8xf32>
    %64 = vector.broadcast %62 : vector<1x1x1x8xf32> to vector<1x14x14x8xf32>
    %65 = arith.mulf %63, %64 : vector<1x14x14x8xf32>
    %66 = arith.addf %58, %65 : vector<1x14x14x8xf32>
    %67 = vector.extract_strided_slice %0 {offsets = [0, 2, 2, 0], sizes = [1, 14, 14, 1], strides = [1, 1, 1, 1]} : vector<1x16x16x1xf32> to vector<1x14x14x1xf32>
    %68 = vector.extract_strided_slice %1 {offsets = [8, 0], sizes = [1, 8], strides = [1, 1]} : vector<9x8xf32> to vector<1x8xf32>
    %69 = vector.shape_cast %68 : vector<1x8xf32> to vector<8xf32>
    %70 = vector.shape_cast %69 : vector<8xf32> to vector<1x1x1x8xf32>
    %71 = vector.broadcast %67 : vector<1x14x14x1xf32> to vector<1x14x14x8xf32>
    %72 = vector.broadcast %70 : vector<1x1x1x8xf32> to vector<1x14x14x8xf32>
    %73 = arith.mulf %71, %72 : vector<1x14x14x8xf32>
    %74 = arith.addf %66, %73 : vector<1x14x14x8xf32>
    %c0_5 = arith.constant 0 : index
    %c0_6 = arith.constant 0 : index
    %75 = vector.load %arg2[%c0_5, %c0_6] : memref<72x8xf32, #tpu.memory_space<vmem>>, vector<72x8xf32>
    %76 = vector.extract_strided_slice %74 {offsets = [0, 0, 0, 0], sizes = [1, 12, 12, 8], strides = [1, 1, 1, 1]} : vector<1x14x14x8xf32> to vector<1x12x12x8xf32>
    %77 = vector.extract_strided_slice %74 {offsets = [0, 0, 1, 0], sizes = [1, 12, 12, 8], strides = [1, 1, 1, 1]} : vector<1x14x14x8xf32> to vector<1x12x12x8xf32>
    %78 = vector.extract_strided_slice %74 {offsets = [0, 0, 2, 0], sizes = [1, 12, 12, 8], strides = [1, 1, 1, 1]} : vector<1x14x14x8xf32> to vector<1x12x12x8xf32>
    %79 = vector.extract_strided_slice %74 {offsets = [0, 1, 0, 0], sizes = [1, 12, 12, 8], strides = [1, 1, 1, 1]} : vector<1x14x14x8xf32> to vector<1x12x12x8xf32>
    %80 = vector.extract_strided_slice %74 {offsets = [0, 1, 1, 0], sizes = [1, 12, 12, 8], strides = [1, 1, 1, 1]} : vector<1x14x14x8xf32> to vector<1x12x12x8xf32>
    %81 = vector.extract_strided_slice %74 {offsets = [0, 1, 2, 0], sizes = [1, 12, 12, 8], strides = [1, 1, 1, 1]} : vector<1x14x14x8xf32> to vector<1x12x12x8xf32>
    %82 = vector.extract_strided_slice %74 {offsets = [0, 2, 0, 0], sizes = [1, 12, 12, 8], strides = [1, 1, 1, 1]} : vector<1x14x14x8xf32> to vector<1x12x12x8xf32>
    %83 = vector.extract_strided_slice %74 {offsets = [0, 2, 1, 0], sizes = [1, 12, 12, 8], strides = [1, 1, 1, 1]} : vector<1x14x14x8xf32> to vector<1x12x12x8xf32>
    %84 = vector.extract_strided_slice %74 {offsets = [0, 2, 2, 0], sizes = [1, 12, 12, 8], strides = [1, 1, 1, 1]} : vector<1x14x14x8xf32> to vector<1x12x12x8xf32>
    %85 = tpu.concatenate %76, %77, %78, %79, %80, %81, %82, %83, %84 in 3 : vector<1x12x12x8xf32>, vector<1x12x12x8xf32>, vector<1x12x12x8xf32>, vector<1x12x12x8xf32>, vector<1x12x12x8xf32>, vector<1x12x12x8xf32>, vector<1x12x12x8xf32>, vector<1x12x12x8xf32>, vector<1x12x12x8xf32> -> vector<1x12x12x72xf32>
    %86 = vector.shape_cast %85 : vector<1x12x12x72xf32> to vector<144x72xf32>
    %cst_7 = arith.constant dense<0.000000e+00> : vector<144x8xf32>
    %87 = tpu.matmul %86, %75, %cst_7 {dimension_numbers = #tpu.dot_dimension_numbers<[1], [0], [0], [1], [0, 0, 1, 1], [], []>} : vector<144x72xf32>, vector<72x8xf32>, vector<144x8xf32> -> vector<144x8xf32>
    %88 = vector.shape_cast %87 : vector<144x8xf32> to vector<1x12x12x8xf32>
    %89 = vector.shape_cast %88 : vector<1x12x12x8xf32> to vector<6x2x12x8xf32>
    %90 = vector.extract_strided_slice %89 {offsets = [0, 0, 0, 0], sizes = [6, 1, 12, 8], strides = [1, 1, 1, 1]} : vector<6x2x12x8xf32> to vector<6x1x12x8xf32>
    %91 = vector.shape_cast %90 : vector<6x1x12x8xf32> to vector<6x12x8xf32>
    %92 = vector.shape_cast %91 : vector<6x12x8xf32> to vector<6x6x2x8xf32>
    %93 = vector.extract_strided_slice %92 {offsets = [0, 0, 0, 0], sizes = [6, 6, 1, 8], strides = [1, 1, 1, 1]} : vector<6x6x2x8xf32> to vector<6x6x1x8xf32>
    %94 = vector.shape_cast %93 : vector<6x6x1x8xf32> to vector<6x6x8xf32>
    %c0_8 = arith.constant 0 : index
    %c0_9 = arith.constant 0 : index
    %95 = vector.load %arg3[%c0_8, %c0_9] : memref<1x8xf32, #tpu.memory_space<vmem>>, vector<1x8xf32>
    %96 = vector.shape_cast %95 : vector<1x8xf32> to vector<8xf32>
    %97 = vector.shape_cast %96 : vector<8xf32> to vector<1x1x8xf32>
    %98 = vector.broadcast %97 : vector<1x1x8xf32> to vector<6x6x8xf32>
    %99 = arith.mulf %94, %98 : vector<6x6x8xf32>
    %cst_10 = arith.constant dense<0.000000e+00> : vector<6x6xf32>
    %100 = vector.multi_reduction <add>, %99, %cst_10 [2] : vector<6x6x8xf32> to vector<6x6xf32>
    %101 = vector.shape_cast %100 : vector<6x6xf32> to vector<1x6x6xf32>
    %c0_11 = arith.constant 0 : index
    %c0_12 = arith.constant 0 : index
    %c0_13 = arith.constant 0 : index
    %102 = vector.load %arg4[%c0_11, %c0_12, %c0_13] : memref<1x6x6xf32, #tpu.memory_space<vmem>>, vector<1x6x6xf32>
    tpu.vector_store %arg4[%c0_11, %c0_12, %c0_13], %101 {strides = array<i32>} : memref<1x6x6xf32, #tpu.memory_space<vmem>>, vector<1x6x6xf32>,
    return
  }
}

</mosaic_0001>

<llo_original>
// kernel: _forward_impl.1
$region0: #{_forward_impl.1}
  #allocation0 [shape = 'u32[]', space=smem, size = 0x4, offset = 0x4, fixed_abs, tag = 'smem constant byte address 0x4 - core index']
  #allocation1 [shape = 'u32[144,128]{1,0:T(1,128)}', space=vmem, size = 0x12000, scoped, tag = 'internal scratch']
  %s0 = inlined_call_operand.vmem [shape: f32[1,16,16,1], index: 0, kind: input, shape index: {}]
  %s1 = inlined_call_operand.vmem [shape: f32[9,8], index: 1, kind: input, shape index: {}]
  %s2 = inlined_call_operand.vmem [shape: f32[72,8], index: 2, kind: input, shape index: {}]
  %s3 = inlined_call_operand.vmem [shape: f32[1,8], index: 3, kind: input, shape index: {}]
  %s4 = inlined_call_operand.vmem [shape: f32[1,6,6], index: 4, kind: output, shape index: {}]
  %s5 = sld [smem:[#allocation0]]
  $region26: #{_forward_impl.1} parent=0
    _
  %s7 = ssub.s32 1, %s5
  %s8 = scalar_select 0, %s7, %s5
  // Predicated region
  $region2: #{_forward_impl.1} parent=0 // pred_check
    _
  $region3: #{_forward_impl.1} parent=0 // pred_check_branch
    %10 = sbr.rel (0) target = $region5
  $region4: #{_forward_impl.1} parent=0 // pred_region
    _
  $region5: #{_forward_impl.1} parent=0 // pred_fallthru
    _
  // Predicated region
  $region6: #{_forward_impl.1} parent=0 // pred_check
    _
  $region7: #{_forward_impl.1} parent=0 // pred_check_branch
    %12 = sbr.rel (0) target = $region9
  $region8: #{_forward_impl.1} parent=0 // pred_region
    _
  $region9: #{_forward_impl.1} parent=0 // pred_fallthru
    _
  // Predicated region
  $region10: #{_forward_impl.1} parent=0 // pred_check
    _
  $region11: #{_forward_impl.1} parent=0 // pred_check_branch
    %14 = sbr.rel (0) target = $region13
  $region12: #{_forward_impl.1} parent=0 // pred_region
    _
  $region13: #{_forward_impl.1} parent=0 // pred_fallthru
    _
  // Predicated region
  $region14: #{_forward_impl.1} parent=0 // pred_check
    _
  $region15: #{_forward_impl.1} parent=0 // pred_check_branch
    %16 = sbr.rel (0) target = $region17
  $region16: #{_forward_impl.1} parent=0 // pred_region
    _
  $region17: #{_forward_impl.1} parent=0 // pred_fallthru
    _
  %v17 = vld [vmem:[%s0] sm:$0xff]
  %v18 = vld [vmem:[%s0 + $0x8] sm:$0xff]
  %v19 = vld [vmem:[%s0 + $0x10] sm:$0xff]
  %v20 = vld [vmem:[%s0 + $0x18] sm:$0xff]
  %v21 = vld [vmem:[%s0 + $0x20] sm:$0xff]
  %v22 = vld [vmem:[%s0 + $0x28] sm:$0xff]
  %v23 = vld [vmem:[%s0 + $0x30] sm:$0xff]
  %v24 = vld [vmem:[%s0 + $0x38] sm:$0xff]
  %v25 = vld [vmem:[%s0 + $0x40] sm:$0xff]
  %v26 = vld [vmem:[%s0 + $0x48] sm:$0xff]
  %v27 = vld [vmem:[%s0 + $0x50] sm:$0xff]
  %v28 = vld [vmem:[%s0 + $0x58] sm:$0xff]
  %v29 = vld [vmem:[%s0 + $0x60] sm:$0xff]
  %v30 = vld [vmem:[%s0 + $0x68] sm:$0xff]
  %v31 = vld [vmem:[%s0 + $0x70] sm:$0xff]
  %v32 = vld [vmem:[%s0 + $0x78] sm:$0xff]
  %v33 = vld [vmem:[%s0 + $0x80] sm:$0xff]
  %v34 = vld [vmem:[%s0 + $0x88] sm:$0xff]
  %v35 = vld [vmem:[%s0 + $0x90] sm:$0xff]
  %v36 = vld [vmem:[%s0 + $0x98] sm:$0xff]
  %v37 = vld [vmem:[%s0 + $0xa0] sm:$0xff]
  %v38 = vld [vmem:[%s0 + $0xa8] sm:$0xff]
  %v39 = vld [vmem:[%s0 + $0xb0] sm:$0xff]
  %v40 = vld [vmem:[%s0 + $0xb8] sm:$0xff]
  %v41 = vld [vmem:[%s0 + $0xc0] sm:$0xff]
  %v42 = vld [vmem:[%s0 + $0xc8] sm:$0xff]
  %v43 = vld [vmem:[%s0 + $0xd0] sm:$0xff]
  %v44 = vld [vmem:[%s0 + $0xd8] sm:$0xff]
  %v45 = vld [vmem:[%s0 + $0xe0] sm:$0xff]
  %v46 = vld [vmem:[%s0 + $0xe8] sm:$0xff]
  %v47 = vld [vmem:[%s0 + $0xf0] sm:$0xff]
  %v48 = vld [vmem:[%s0 + $0xf8] sm:$0xff]
  %v49 = vld [vmem:[%s1] sm:$0xff]
  %v50 = vld [vmem:[%s1 + $0x8] sm:$0x1]
  %52 = vset.pattern.permute.xlu0 0
  %53 = vperm.xlu0 %52, %v17
  %v54 = vpop.permute.xlu0 %53
  %57 = vset.pattern.permute.xlu0 0
  %58 = vperm.xlu0 %57, %v18
  %v59 = vpop.permute.xlu0 %58
  %62 = vset.pattern.permute.xlu0 0
  %63 = vperm.xlu0 %62, %v19
  %v64 = vpop.permute.xlu0 %63
  %67 = vset.pattern.permute.xlu0 0
  %68 = vperm.xlu0 %67, %v20
  %v69 = vpop.permute.xlu0 %68
  %72 = vset.pattern.permute.xlu0 0
  %73 = vperm.xlu0 %72, %v21
  %v74 = vpop.permute.xlu0 %73
  %77 = vset.pattern.permute.xlu0 0
  %78 = vperm.xlu0 %77, %v22
  %v79 = vpop.permute.xlu0 %78
  %82 = vset.pattern.permute.xlu0 0
  %83 = vperm.xlu0 %82, %v23
  %v84 = vpop.permute.xlu0 %83
  %87 = vset.pattern.permute.xlu0 0
  %88 = vperm.xlu0 %87, %v24
  %v89 = vpop.permute.xlu0 %88
  %92 = vset.pattern.permute.xlu0 0
  %93 = vperm.xlu0 %92, %v25
  %v94 = vpop.permute.xlu0 %93
  %97 = vset.pattern.permute.xlu0 0
  %98 = vperm.xlu0 %97, %v26
  %v99 = vpop.permute.xlu0 %98
  %102 = vset.pattern.permute.xlu0 0
  %103 = vperm.xlu0 %102, %v27
  %v104 = vpop.permute.xlu0 %103
  %107 = vset.pattern.permute.xlu0 0
  %108 = vperm.xlu0 %107, %v28
  %v109 = vpop.permute.xlu0 %108
  %112 = vset.pattern.permute.xlu0 0
  %113 = vperm.xlu0 %112, %v29
  %v114 = vpop.permute.xlu0 %113
  %117 = vset.pattern.permute.xlu0 0
  %118 = vperm.xlu0 %117, %v30
  %v119 = vpop.permute.xlu0 %118
  %122 = vset.pattern.permute.xlu0 0
  %123 = vperm.xlu0 %122, %v31
  %v124 = vpop.permute.xlu0 %123
  %127 = vset.pattern.permute.xlu0 0
  %128 = vperm.xlu0 %127, %v32
  %v129 = vpop.permute.xlu0 %128
  %132 = vset.pattern.permute.xlu0 0
  %133 = vperm.xlu0 %132, %v33
  %v134 = vpop.permute.xlu0 %133
  %137 = vset.pattern.permute.xlu0 0
  %138 = vperm.xlu0 %137, %v34
  %v139 = vpop.permute.xlu0 %138
  %142 = vset.pattern.permute.xlu0 0
  %143 = vperm.xlu0 %142, %v35
  %v144 = vpop.permute.xlu0 %143
  %147 = vset.pattern.permute.xlu0 0
  %148 = vperm.xlu0 %147, %v36
  %v149 = vpop.permute.xlu0 %148
  %152 = vset.pattern.permute.xlu0 0
  %153 = vperm.xlu0 %152, %v37
  %v154 = vpop.permute.xlu0 %153
  %157 = vset.pattern.permute.xlu0 0
  %158 = vperm.xlu0 %157, %v38
  %v159 = vpop.permute.xlu0 %158
  %162 = vset.pattern.permute.xlu0 0
  %163 = vperm.xlu0 %162, %v39
  %v164 = vpop.permute.xlu0 %163
  %167 = vset.pattern.permute.xlu0 0
  %168 = vperm.xlu0 %167, %v40
  %v169 = vpop.permute.xlu0 %168
  %172 = vset.pattern.permute.xlu0 0
  %173 = vperm.xlu0 %172, %v41
  %v174 = vpop.permute.xlu0 %173
  %177 = vset.pattern.permute.xlu0 0
  %178 = vperm.xlu0 %177, %v42
  %v179 = vpop.permute.xlu0 %178
  %182 = vset.pattern.permute.xlu0 0
  %183 = vperm.xlu0 %182, %v43
  %v184 = vpop.permute.xlu0 %183
  %187 = vset.pattern.permute.xlu0 0
  %188 = vperm.xlu0 %187, %v44
  %v189 = vpop.permute.xlu0 %188
  %v191 = vlaneseq
  %v192 = vshrl.u32 %v191, 7
  %v193 = vsub.s32 0, %v192
  %v194 = vrot.slane %v49, %v193
  %v195 = vmul.f32 %v54, %v194
  %v196 = vmul.f32 %v59, %v194
  %v197 = vmul.f32 %v64, %v194
  %v198 = vmul.f32 %v69, %v194
  %v199 = vmul.f32 %v74, %v194
  %v200 = vmul.f32 %v79, %v194
  %v201 = vmul.f32 %v84, %v194
  %v202 = vmul.f32 %v89, %v194
  %v203 = vmul.f32 %v94, %v194
  %v204 = vmul.f32 %v99, %v194
  %v205 = vmul.f32 %v104, %v194
  %v206 = vmul.f32 %v109, %v194
  %v207 = vmul.f32 %v114, %v194
  %v208 = vmul.f32 %v119, %v194
  %v209 = vmul.f32 %v124, %v194
  %v210 = vmul.f32 %v129, %v194
  %v211 = vmul.f32 %v134, %v194
  %v212 = vmul.f32 %v139, %v194
  %v213 = vmul.f32 %v144, %v194
  %v214 = vmul.f32 %v149, %v194
  %v215 = vmul.f32 %v154, %v194
  %v216 = vmul.f32 %v159, %v194
  %v217 = vmul.f32 %v164, %v194
  %v218 = vmul.f32 %v169, %v194
  %v219 = vmul.f32 %v174, %v194
  %v220 = vmul.f32 %v179, %v194
  %v221 = vmul.f32 %v184, %v194
  %v222 = vmul.f32 %v189, %v194
  %v223 = vadd.f32 %v195, 0.0
  %v224 = vadd.f32 %v196, 0.0
  %v225 = vadd.f32 %v197, 0.0
  %v226 = vadd.f32 %v198, 0.0
  %v227 = vadd.f32 %v199, 0.0
  %v228 = vadd.f32 %v200, 0.0
  %v229 = vadd.f32 %v201, 0.0
  %v230 = vadd.f32 %v202, 0.0
  %v231 = vadd.f32 %v203, 0.0
  %v232 = vadd.f32 %v204, 0.0
  %v233 = vadd.f32 %v205, 0.0
  %v234 = vadd.f32 %v206, 0.0
  %v235 = vadd.f32 %v207, 0.0
  %v236 = vadd.f32 %v208, 0.0
  %v237 = vadd.f32 %v209, 0.0
  %v238 = vadd.f32 %v210, 0.0
  %v239 = vadd.f32 %v211, 0.0
  %v240 = vadd.f32 %v212, 0.0
  %v241 = vadd.f32 %v213, 0.0
  %v242 = vadd.f32 %v214, 0.0
  %v243 = vadd.f32 %v215, 0.0
  %v244 = vadd.f32 %v216, 0.0
  %v245 = vadd.f32 %v217, 0.0
  %v246 = vadd.f32 %v218, 0.0
  %v247 = vadd.f32 %v219, 0.0
  %v248 = vadd.f32 %v220, 0.0
  %v249 = vadd.f32 %v221, 0.0
  %v250 = vadd.f32 %v222, 0.0
  %v251 = vlaneseq
  %v252 = vshrl.u32 %v251, 7
  %v253 = vsub.s32 1, %v252
  %v254 = vrot.slane %v49, %v253
  %v255 = vmul.f32 %v54, %v254
  %v256 = vmul.f32 %v59, %v254
  %v257 = vmul.f32 %v64, %v254
  %v258 = vmul.f32 %v69, %v254
  %v259 = vmul.f32 %v74, %v254
  %v260 = vmul.f32 %v79, %v254
  %v261 = vmul.f32 %v84, %v254
  %v262 = vmul.f32 %v89, %v254
  %v263 = vmul.f32 %v94, %v254
  %v264 = vmul.f32 %v99, %v254
  %v265 = vmul.f32 %v104, %v254
  %v266 = vmul.f32 %v109, %v254
  %v267 = vmul.f32 %v114, %v254
  %v268 = vmul.f32 %v119, %v254
  %v269 = vmul.f32 %v124, %v254
  %v270 = vmul.f32 %v129, %v254
  %v271 = vmul.f32 %v134, %v254
  %v272 = vmul.f32 %v139, %v254
  %v273 = vmul.f32 %v144, %v254
  %v274 = vmul.f32 %v149, %v254
  %v275 = vmul.f32 %v154, %v254
  %v276 = vmul.f32 %v159, %v254
  %v277 = vmul.f32 %v164, %v254
  %v278 = vmul.f32 %v169, %v254
  %v279 = vmul.f32 %v174, %v254
  %v280 = vmul.f32 %v179, %v254
  %v281 = vmul.f32 %v184, %v254
  %v282 = vmul.f32 %v189, %v254
  %vm311 = vcmask 1046528
  %v312 = vrot.slane %v255, 1
  %v313 = vrot.slane %v256, 1
  %v314 = vsel %vm311, %v312, %v313
  %v315 = vrot.slane %v257, 1
  %v316 = vrot.slane %v258, 1
  %v317 = vsel %vm311, %v315, %v316
  %v318 = vrot.slane %v259, 1
  %v319 = vrot.slane %v260, 1
  %v320 = vsel %vm311, %v318, %v319
  %v321 = vrot.slane %v261, 1
  %v322 = vrot.slane %v262, 1
  %v323 = vsel %vm311, %v321, %v322
  %v324 = vrot.slane %v263, 1
  %v325 = vrot.slane %v264, 1
  %v326 = vsel %vm311, %v324, %v325
  %v327 = vrot.slane %v265, 1
  %v328 = vrot.slane %v266, 1
  %v329 = vsel %vm311, %v327, %v328
  %v330 = vrot.slane %v267, 1
  %v331 = vrot.slane %v268, 1
  %v332 = vsel %vm311, %v330, %v331
  %v333 = vrot.slane %v269, 1
  %v334 = vrot.slane %v270, 1
  %v335 = vsel %vm311, %v333, %v334
  %v336 = vrot.slane %v271, 1
  %v337 = vrot.slane %v272, 1
  %v338 = vsel %vm311, %v336, %v337
  %v339 = vrot.slane %v273, 1
  %v340 = vrot.slane %v274, 1
  %v341 = vsel %vm311, %v339, %v340
  %v342 = vrot.slane %v275, 1
  %v343 = vrot.slane %v276, 1
  %v344 = vsel %vm311, %v342, %v343
  %v345 = vrot.slane %v277, 1
  %v346 = vrot.slane %v278, 1
  %v347 = vsel %vm311, %v345, %v346
  %v348 = vrot.slane %v279, 1
  %v349 = vrot.slane %v280, 1
  %v350 = vsel %vm311, %v348, %v349
  %v351 = vrot.slane %v281, 1
  %v352 = vrot.slane %v282, 1
  %v353 = vsel %vm311, %v351, %v352
  %v382 = vadd.f32 %v223, %v314
  %v383 = vadd.f32 %v224, %v313
  %v384 = vadd.f32 %v225, %v317
  %v385 = vadd.f32 %v226, %v316
  %v386 = vadd.f32 %v227, %v320
  %v387 = vadd.f32 %v228, %v319
  %v388 = vadd.f32 %v229, %v323
  %v389 = vadd.f32 %v230, %v322
  %v390 = vadd.f32 %v231, %v326
  %v391 = vadd.f32 %v232, %v325
  %v392 = vadd.f32 %v233, %v329
  %v393 = vadd.f32 %v234, %v328
  %v394 = vadd.f32 %v235, %v332
  %v395 = vadd.f32 %v236, %v331
  %v396 = vadd.f32 %v237, %v335
  %v397 = vadd.f32 %v238, %v334
  %v398 = vadd.f32 %v239, %v338
  %v399 = vadd.f32 %v240, %v337
  %v400 = vadd.f32 %v241, %v341
  %v401 = vadd.f32 %v242, %v340
  %v402 = vadd.f32 %v243, %v344
  %v403 = vadd.f32 %v244, %v343
  %v404 = vadd.f32 %v245, %v347
  %v405 = vadd.f32 %v246, %v346
  %v406 = vadd.f32 %v247, %v350
  %v407 = vadd.f32 %v248, %v349
  %v408 = vadd.f32 %v249, %v353
  %v409 = vadd.f32 %v250, %v352
  %v410 = vlaneseq
  %v411 = vshrl.u32 %v410, 7
  %v412 = vsub.s32 2, %v411
  %v413 = vrot.slane %v49, %v412
  %v414 = vmul.f32 %v54, %v413
  %v415 = vmul.f32 %v59, %v413
  %v416 = vmul.f32 %v64, %v413
  %v417 = vmul.f32 %v69, %v413
  %v418 = vmul.f32 %v74, %v413
  %v419 = vmul.f32 %v79, %v413
  %v420 = vmul.f32 %v84, %v413
  %v421 = vmul.f32 %v89, %v413
  %v422 = vmul.f32 %v94, %v413
  %v423 = vmul.f32 %v99, %v413
  %v424 = vmul.f32 %v104, %v413
  %v425 = vmul.f32 %v109, %v413
  %v426 = vmul.f32 %v114, %v413
  %v427 = vmul.f32 %v119, %v413
  %v428 = vmul.f32 %v124, %v413
  %v429 = vmul.f32 %v129, %v413
  %v430 = vmul.f32 %v134, %v413
  %v431 = vmul.f32 %v139, %v413
  %v432 = vmul.f32 %v144, %v413
  %v433 = vmul.f32 %v149, %v413
  %v434 = vmul.f32 %v154, %v413
  %v435 = vmul.f32 %v159, %v413
  %v436 = vmul.f32 %v164, %v413
  %v437 = vmul.f32 %v169, %v413
  %v438 = vmul.f32 %v174, %v413
  %v439 = vmul.f32 %v179, %v413
  %v440 = vmul.f32 %v184, %v413
  %v441 = vmul.f32 %v189, %v413
  %vm470 = vcmask 1045504
  %v471 = vrot.slane %v414, 2
  %v472 = vrot.slane %v415, 2
  %v473 = vsel %vm470, %v471, %v472
  %v474 = vrot.slane %v416, 2
  %v475 = vrot.slane %v417, 2
  %v476 = vsel %vm470, %v474, %v475
  %v477 = vrot.slane %v418, 2
  %v478 = vrot.slane %v419, 2
  %v479 = vsel %vm470, %v477, %v478
  %v480 = vrot.slane %v420, 2
  %v481 = vrot.slane %v421, 2
  %v482 = vsel %vm470, %v480, %v481
  %v483 = vrot.slane %v422, 2
  %v484 = vrot.slane %v423, 2
  %v485 = vsel %vm470, %v483, %v484
  %v486 = vrot.slane %v424, 2
  %v487 = vrot.slane %v425, 2
  %v488 = vsel %vm470, %v486, %v487
  %v489 = vrot.slane %v426, 2
  %v490 = vrot.slane %v427, 2
  %v491 = vsel %vm470, %v489, %v490
  %v492 = vrot.slane %v428, 2
  %v493 = vrot.slane %v429, 2
  %v494 = vsel %vm470, %v492, %v493
  %v495 = vrot.slane %v430, 2
  %v496 = vrot.slane %v431, 2
  %v497 = vsel %vm470, %v495, %v496
  %v498 = vrot.slane %v432, 2
  %v499 = vrot.slane %v433, 2
  %v500 = vsel %vm470, %v498, %v499
  %v501 = vrot.slane %v434, 2
  %v502 = vrot.slane %v435, 2
  %v503 = vsel %vm470, %v501, %v502
  %v504 = vrot.slane %v436, 2
  %v505 = vrot.slane %v437, 2
  %v506 = vsel %vm470, %v504, %v505
  %v507 = vrot.slane %v438, 2
  %v508 = vrot.slane %v439, 2
  %v509 = vsel %vm470, %v507, %v508
  %v510 = vrot.slane %v440, 2
  %v511 = vrot.slane %v441, 2
  %v512 = vsel %vm470, %v510, %v511
  %v541 = vadd.f32 %v382, %v473
  %v542 = vadd.f32 %v383, %v472
  %v543 = vadd.f32 %v384, %v476
  %v544 = vadd.f32 %v385, %v475
  %v545 = vadd.f32 %v386, %v479
  %v546 = vadd.f32 %v387, %v478
  %v547 = vadd.f32 %v388, %v482
  %v548 = vadd.f32 %v389, %v481
  %v549 = vadd.f32 %v390, %v485
  %v550 = vadd.f32 %v391, %v484
  %v551 = vadd.f32 %v392, %v488
  %v552 = vadd.f32 %v393, %v487
  %v553 = vadd.f32 %v394, %v491
  %v554 = vadd.f32 %v395, %v490
  %v555 = vadd.f32 %v396, %v494
  %v556 = vadd.f32 %v397, %v493
  %v557 = vadd.f32 %v398, %v497
  %v558 = vadd.f32 %v399, %v496
  %v559 = vadd.f32 %v400, %v500
  %v560 = vadd.f32 %v401, %v499
  %v561 = vadd.f32 %v402, %v503
  %v562 = vadd.f32 %v403, %v502
  %v563 = vadd.f32 %v404, %v506
  %v564 = vadd.f32 %v405, %v505
  %v565 = vadd.f32 %v406, %v509
  %v566 = vadd.f32 %v407, %v508
  %v567 = vadd.f32 %v408, %v512
  %v568 = vadd.f32 %v409, %v511
  %570 = vset.pattern.permute.xlu0 0
  %571 = vperm.xlu0 %570, %v45
  %v572 = vpop.permute.xlu0 %571
  %575 = vset.pattern.permute.xlu0 0
  %576 = vperm.xlu0 %575, %v46
  %v577 = vpop.permute.xlu0 %576
  %v579 = vlaneseq
  %v580 = vshrl.u32 %v579, 7
  %v581 = vsub.s32 3, %v580
  %v582 = vrot.slane %v49, %v581
  %v583 = vmul.f32 %v64, %v582
  %v584 = vmul.f32 %v69, %v582
  %v585 = vmul.f32 %v74, %v582
  %v586 = vmul.f32 %v79, %v582
  %v587 = vmul.f32 %v84, %v582
  %v588 = vmul.f32 %v89, %v582
  %v589 = vmul.f32 %v94, %v582
  %v590 = vmul.f32 %v99, %v582
  %v591 = vmul.f32 %v104, %v582
  %v592 = vmul.f32 %v109, %v582
  %v593 = vmul.f32 %v114, %v582
  %v594 = vmul.f32 %v119, %v582
  %v595 = vmul.f32 %v124, %v582
  %v596 = vmul.f32 %v129, %v582
  %v597 = vmul.f32 %v134, %v582
  %v598 = vmul.f32 %v139, %v582
  %v599 = vmul.f32 %v144, %v582
  %v600 = vmul.f32 %v149, %v582
  %v601 = vmul.f32 %v154, %v582
  %v602 = vmul.f32 %v159, %v582
  %v603 = vmul.f32 %v164, %v582
  %v604 = vmul.f32 %v169, %v582
  %v605 = vmul.f32 %v174, %v582
  %v606 = vmul.f32 %v179, %v582
  %v607 = vmul.f32 %v184, %v582
  %v608 = vmul.f32 %v189, %v582
  %v609 = vmul.f32 %v572, %v582
  %v610 = vmul.f32 %v577, %v582
  %v611 = vadd.f32 %v541, %v583
  %v612 = vadd.f32 %v542, %v584
  %v613 = vadd.f32 %v543, %v585
  %v614 = vadd.f32 %v544, %v586
  %v615 = vadd.f32 %v545, %v587
  %v616 = vadd.f32 %v546, %v588
  %v617 = vadd.f32 %v547, %v589
  %v618 = vadd.f32 %v548, %v590
  %v619 = vadd.f32 %v549, %v591
  %v620 = vadd.f32 %v550, %v592
  %v621 = vadd.f32 %v551, %v593
  %v622 = vadd.f32 %v552, %v594
  %v623 = vadd.f32 %v553, %v595
  %v624 = vadd.f32 %v554, %v596
  %v625 = vadd.f32 %v555, %v597
  %v626 = vadd.f32 %v556, %v598
  %v627 = vadd.f32 %v557, %v599
  %v628 = vadd.f32 %v558, %v600
  %v629 = vadd.f32 %v559, %v601
  %v630 = vadd.f32 %v560, %v602
  %v631 = vadd.f32 %v561, %v603
  %v632 = vadd.f32 %v562, %v604
  %v633 = vadd.f32 %v563, %v605
  %v634 = vadd.f32 %v564, %v606
  %v635 = vadd.f32 %v565, %v607
  %v636 = vadd.f32 %v566, %v608
  %v637 = vadd.f32 %v567, %v609
  %v638 = vadd.f32 %v568, %v610
  %v639 = vlaneseq
  %v640 = vshrl.u32 %v639, 7
  %v641 = vsub.s32 4, %v640
  %v642 = vrot.slane %v49, %v641
  %v643 = vmul.f32 %v64, %v642
  %v644 = vmul.f32 %v69, %v642
  %v645 = vmul.f32 %v74, %v642
  %v646 = vmul.f32 %v79, %v642
  %v647 = vmul.f32 %v84, %v642
  %v648 = vmul.f32 %v89, %v642
  %v649 = vmul.f32 %v94, %v642
  %v650 = vmul.f32 %v99, %v642
  %v651 = vmul.f32 %v104, %v642
  %v652 = vmul.f32 %v109, %v642
  %v653 = vmul.f32 %v114, %v642
  %v654 = vmul.f32 %v119, %v642
  %v655 = vmul.f32 %v124, %v642
  %v656 = vmul.f32 %v129, %v642
  %v657 = vmul.f32 %v134, %v642
  %v658 = vmul.f32 %v139, %v642
  %v659 = vmul.f32 %v144, %v642
  %v660 = vmul.f32 %v149, %v642
  %v661 = vmul.f32 %v154, %v642
  %v662 = vmul.f32 %v159, %v642
  %v663 = vmul.f32 %v164, %v642
  %v664 = vmul.f32 %v169, %v642
  %v665 = vmul.f32 %v174, %v642
  %v666 = vmul.f32 %v179, %v642
  %v667 = vmul.f32 %v184, %v642
  %v668 = vmul.f32 %v189, %v642
  %v669 = vmul.f32 %v572, %v642
  %v670 = vmul.f32 %v577, %v642
  %v699 = vrot.slane %v643, 1
  %v700 = vrot.slane %v644, 1
  %v701 = vsel %vm311, %v699, %v700
  %v702 = vrot.slane %v645, 1
  %v703 = vrot.slane %v646, 1
  %v704 = vsel %vm311, %v702, %v703
  %v705 = vrot.slane %v647, 1
  %v706 = vrot.slane %v648, 1
  %v707 = vsel %vm311, %v705, %v706
  %v708 = vrot.slane %v649, 1
  %v709 = vrot.slane %v650, 1
  %v710 = vsel %vm311, %v708, %v709
  %v711 = vrot.slane %v651, 1
  %v712 = vrot.slane %v652, 1
  %v713 = vsel %vm311, %v711, %v712
  %v714 = vrot.slane %v653, 1
  %v715 = vrot.slane %v654, 1
  %v716 = vsel %vm311, %v714, %v715
  %v717 = vrot.slane %v655, 1
  %v718 = vrot.slane %v656, 1
  %v719 = vsel %vm311, %v717, %v718
  %v720 = vrot.slane %v657, 1
  %v721 = vrot.slane %v658, 1
  %v722 = vsel %vm311, %v720, %v721
  %v723 = vrot.slane %v659, 1
  %v724 = vrot.slane %v660, 1
  %v725 = vsel %vm311, %v723, %v724
  %v726 = vrot.slane %v661, 1
  %v727 = vrot.slane %v662, 1
  %v728 = vsel %vm311, %v726, %v727
  %v729 = vrot.slane %v663, 1
  %v730 = vrot.slane %v664, 1
  %v731 = vsel %vm311, %v729, %v730
  %v732 = vrot.slane %v665, 1
  %v733 = vrot.slane %v666, 1
  %v734 = vsel %vm311, %v732, %v733
  %v735 = vrot.slane %v667, 1
  %v736 = vrot.slane %v668, 1
  %v737 = vsel %vm311, %v735, %v736
  %v738 = vrot.slane %v669, 1
  %v739 = vrot.slane %v670, 1
  %v740 = vsel %vm311, %v738, %v739
  %v769 = vadd.f32 %v611, %v701
  %v770 = vadd.f32 %v612, %v700
  %v771 = vadd.f32 %v613, %v704
  %v772 = vadd.f32 %v614, %v703
  %v773 = vadd.f32 %v615, %v707
  %v774 = vadd.f32 %v616, %v706
  %v775 = vadd.f32 %v617, %v710
  %v776 = vadd.f32 %v618, %v709
  %v777 = vadd.f32 %v619, %v713
  %v778 = vadd.f32 %v620, %v712
  %v779 = vadd.f32 %v621, %v716
  %v780 = vadd.f32 %v622, %v715
  %v781 = vadd.f32 %v623, %v719
  %v782 = vadd.f32 %v624, %v718
  %v783 = vadd.f32 %v625, %v722
  %v784 = vadd.f32 %v626, %v721
  %v785 = vadd.f32 %v627, %v725
  %v786 = vadd.f32 %v628, %v724
  %v787 = vadd.f32 %v629, %v728
  %v788 = vadd.f32 %v630, %v727
  %v789 = vadd.f32 %v631, %v731
  %v790 = vadd.f32 %v632, %v730
  %v791 = vadd.f32 %v633, %v734
  %v792 = vadd.f32 %v634, %v733
  %v793 = vadd.f32 %v635, %v737
  %v794 = vadd.f32 %v636, %v736
  %v795 = vadd.f32 %v637, %v740
  %v796 = vadd.f32 %v638, %v739
  %v797 = vlaneseq
  %v798 = vshrl.u32 %v797, 7
  %v799 = vsub.s32 5, %v798
  %v800 = vrot.slane %v49, %v799
  %v801 = vmul.f32 %v64, %v800
  %v802 = vmul.f32 %v69, %v800
  %v803 = vmul.f32 %v74, %v800
  %v804 = vmul.f32 %v79, %v800
  %v805 = vmul.f32 %v84, %v800
  %v806 = vmul.f32 %v89, %v800
  %v807 = vmul.f32 %v94, %v800
  %v808 = vmul.f32 %v99, %v800
  %v809 = vmul.f32 %v104, %v800
  %v810 = vmul.f32 %v109, %v800
  %v811 = vmul.f32 %v114, %v800
  %v812 = vmul.f32 %v119, %v800
  %v813 = vmul.f32 %v124, %v800
  %v814 = vmul.f32 %v129, %v800
  %v815 = vmul.f32 %v134, %v800
  %v816 = vmul.f32 %v139, %v800
  %v817 = vmul.f32 %v144, %v800
  %v818 = vmul.f32 %v149, %v800
  %v819 = vmul.f32 %v154, %v800
  %v820 = vmul.f32 %v159, %v800
  %v821 = vmul.f32 %v164, %v800
  %v822 = vmul.f32 %v169, %v800
  %v823 = vmul.f32 %v174, %v800
  %v824 = vmul.f32 %v179, %v800
  %v825 = vmul.f32 %v184, %v800
  %v826 = vmul.f32 %v189, %v800
  %v827 = vmul.f32 %v572, %v800
  %v828 = vmul.f32 %v577, %v800
  %v857 = vrot.slane %v801, 2
  %v858 = vrot.slane %v802, 2
  %v859 = vsel %vm470, %v857, %v858
  %v860 = vrot.slane %v803, 2
  %v861 = vrot.slane %v804, 2
  %v862 = vsel %vm470, %v860, %v861
  %v863 = vrot.slane %v805, 2
  %v864 = vrot.slane %v806, 2
  %v865 = vsel %vm470, %v863, %v864
  %v866 = vrot.slane %v807, 2
  %v867 = vrot.slane %v808, 2
  %v868 = vsel %vm470, %v866, %v867
  %v869 = vrot.slane %v809, 2
  %v870 = vrot.slane %v810, 2
  %v871 = vsel %vm470, %v869, %v870
  %v872 = vrot.slane %v811, 2
  %v873 = vrot.slane %v812, 2
  %v874 = vsel %vm470, %v872, %v873
  %v875 = vrot.slane %v813, 2
  %v876 = vrot.slane %v814, 2
  %v877 = vsel %vm470, %v875, %v876
  %v878 = vrot.slane %v815, 2
  %v879 = vrot.slane %v816, 2
  %v880 = vsel %vm470, %v878, %v879
  %v881 = vrot.slane %v817, 2
  %v882 = vrot.slane %v818, 2
  %v883 = vsel %vm470, %v881, %v882
  %v884 = vrot.slane %v819, 2
  %v885 = vrot.slane %v820, 2
  %v886 = vsel %vm470, %v884, %v885
  %v887 = vrot.slane %v821, 2
  %v888 = vrot.slane %v822, 2
  %v889 = vsel %vm470, %v887, %v888
  %v890 = vrot.slane %v823, 2
  %v891 = vrot.slane %v824, 2
  %v892 = vsel %vm470, %v890, %v891
  %v893 = vrot.slane %v825, 2
  %v894 = vrot.slane %v826, 2
  %v895 = vsel %vm470, %v893, %v894
  %v896 = vrot.slane %v827, 2
  %v897 = vrot.slane %v828, 2
  %v898 = vsel %vm470, %v896, %v897
  %v927 = vadd.f32 %v769, %v859
  %v928 = vadd.f32 %v770, %v858
  %v929 = vadd.f32 %v771, %v862
  %v930 = vadd.f32 %v772, %v861
  %v931 = vadd.f32 %v773, %v865
  %v932 = vadd.f32 %v774, %v864
  %v933 = vadd.f32 %v775, %v868
  %v934 = vadd.f32 %v776, %v867
  %v935 = vadd.f32 %v777, %v871
  %v936 = vadd.f32 %v778, %v870
  %v937 = vadd.f32 %v779, %v874
  %v938 = vadd.f32 %v780, %v873
  %v939 = vadd.f32 %v781, %v877
  %v940 = vadd.f32 %v782, %v876
  %v941 = vadd.f32 %v783, %v880
  %v942 = vadd.f32 %v784, %v879
  %v943 = vadd.f32 %v785, %v883
  %v944 = vadd.f32 %v786, %v882
  %v945 = vadd.f32 %v787, %v886
  %v946 = vadd.f32 %v788, %v885
  %v947 = vadd.f32 %v789, %v889
  %v948 = vadd.f32 %v790, %v888
  %v949 = vadd.f32 %v791, %v892
  %v950 = vadd.f32 %v792, %v891
  %v951 = vadd.f32 %v793, %v895
  %v952 = vadd.f32 %v794, %v894
  %v953 = vadd.f32 %v795, %v898
  %v954 = vadd.f32 %v796, %v897
  %956 = vset.pattern.permute.xlu0 0
  %957 = vperm.xlu0 %956, %v47
  %v958 = vpop.permute.xlu0 %957
  %961 = vset.pattern.permute.xlu0 0
  %962 = vperm.xlu0 %961, %v48
  %v963 = vpop.permute.xlu0 %962
  %v965 = vlaneseq
  %v966 = vshrl.u32 %v965, 7
  %v967 = vsub.s32 6, %v966
  %v968 = vrot.slane %v49, %v967
  %v969 = vmul.f32 %v74, %v968
  %v970 = vmul.f32 %v79, %v968
  %v971 = vmul.f32 %v84, %v968
  %v972 = vmul.f32 %v89, %v968
  %v973 = vmul.f32 %v94, %v968
  %v974 = vmul.f32 %v99, %v968
  %v975 = vmul.f32 %v104, %v968
  %v976 = vmul.f32 %v109, %v968
  %v977 = vmul.f32 %v114, %v968
  %v978 = vmul.f32 %v119, %v968
  %v979 = vmul.f32 %v124, %v968
  %v980 = vmul.f32 %v129, %v968
  %v981 = vmul.f32 %v134, %v968
  %v982 = vmul.f32 %v139, %v968
  %v983 = vmul.f32 %v144, %v968
  %v984 = vmul.f32 %v149, %v968
  %v985 = vmul.f32 %v154, %v968
  %v986 = vmul.f32 %v159, %v968
  %v987 = vmul.f32 %v164, %v968
  %v988 = vmul.f32 %v169, %v968
  %v989 = vmul.f32 %v174, %v968
  %v990 = vmul.f32 %v179, %v968
  %v991 = vmul.f32 %v184, %v968
  %v992 = vmul.f32 %v189, %v968
  %v993 = vmul.f32 %v572, %v968
  %v994 = vmul.f32 %v577, %v968
  %v995 = vmul.f32 %v958, %v968
  %v996 = vmul.f32 %v963, %v968
  %v997 = vadd.f32 %v927, %v969
  %v998 = vadd.f32 %v928, %v970
  %v999 = vadd.f32 %v929, %v971
  %v1000 = vadd.f32 %v930, %v972
  %v1001 = vadd.f32 %v931, %v973
  %v1002 = vadd.f32 %v932, %v974
  %v1003 = vadd.f32 %v933, %v975
  %v1004 = vadd.f32 %v934, %v976
  %v1005 = vadd.f32 %v935, %v977
  %v1006 = vadd.f32 %v936, %v978
  %v1007 = vadd.f32 %v937, %v979
  %v1008 = vadd.f32 %v938, %v980
  %v1009 = vadd.f32 %v939, %v981
  %v1010 = vadd.f32 %v940, %v982
  %v1011 = vadd.f32 %v941, %v983
  %v1012 = vadd.f32 %v942, %v984
  %v1013 = vadd.f32 %v943, %v985
  %v1014 = vadd.f32 %v944, %v986
  %v1015 = vadd.f32 %v945, %v987
  %v1016 = vadd.f32 %v946, %v988
  %v1017 = vadd.f32 %v947, %v989
  %v1018 = vadd.f32 %v948, %v990
  %v1019 = vadd.f32 %v949, %v991
  %v1020 = vadd.f32 %v950, %v992
  %v1021 = vadd.f32 %v951, %v993
  %v1022 = vadd.f32 %v952, %v994
  %v1023 = vadd.f32 %v953, %v995
  %v1024 = vadd.f32 %v954, %v996
  %v1025 = vlaneseq
  %v1026 = vshrl.u32 %v1025, 7
  %v1027 = vsub.s32 7, %v1026
  %v1028 = vrot.slane %v49, %v1027
  %v1029 = vmul.f32 %v74, %v1028
  %v1030 = vmul.f32 %v79, %v1028
  %v1031 = vmul.f32 %v84, %v1028
  %v1032 = vmul.f32 %v89, %v1028
  %v1033 = vmul.f32 %v94, %v1028
  %v1034 = vmul.f32 %v99, %v1028
  %v1035 = vmul.f32 %v104, %v1028
  %v1036 = vmul.f32 %v109, %v1028
  %v1037 = vmul.f32 %v114, %v1028
  %v1038 = vmul.f32 %v119, %v1028
  %v1039 = vmul.f32 %v124, %v1028
  %v1040 = vmul.f32 %v129, %v1028
  %v1041 = vmul.f32 %v134, %v1028
  %v1042 = vmul.f32 %v139, %v1028
  %v1043 = vmul.f32 %v144, %v1028
  %v1044 = vmul.f32 %v149, %v1028
  %v1045 = vmul.f32 %v154, %v1028
  %v1046 = vmul.f32 %v159, %v1028
  %v1047 = vmul.f32 %v164, %v1028
  %v1048 = vmul.f32 %v169, %v1028
  %v1049 = vmul.f32 %v174, %v1028
  %v1050 = vmul.f32 %v179, %v1028
  %v1051 = vmul.f32 %v184, %v1028
  %v1052 = vmul.f32 %v189, %v1028
  %v1053 = vmul.f32 %v572, %v1028
  %v1054 = vmul.f32 %v577, %v1028
  %v1055 = vmul.f32 %v958, %v1028
  %v1056 = vmul.f32 %v963, %v1028
  %v1085 = vrot.slane %v1029, 1
  %v1086 = vrot.slane %v1030, 1
  %v1087 = vsel %vm311, %v1085, %v1086
  %v1088 = vrot.slane %v1031, 1
  %v1089 = vrot.slane %v1032, 1
  %v1090 = vsel %vm311, %v1088, %v1089
  %v1091 = vrot.slane %v1033, 1
  %v1092 = vrot.slane %v1034, 1
  %v1093 = vsel %vm311, %v1091, %v1092
  %v1094 = vrot.slane %v1035, 1
  %v1095 = vrot.slane %v1036, 1
  %v1096 = vsel %vm311, %v1094, %v1095
  %v1097 = vrot.slane %v1037, 1
  %v1098 = vrot.slane %v1038, 1
  %v1099 = vsel %vm311, %v1097, %v1098
  %v1100 = vrot.slane %v1039, 1
  %v1101 = vrot.slane %v1040, 1
  %v1102 = vsel %vm311, %v1100, %v1101
  %v1103 = vrot.slane %v1041, 1
  %v1104 = vrot.slane %v1042, 1
  %v1105 = vsel %vm311, %v1103, %v1104
  %v1106 = vrot.slane %v1043, 1
  %v1107 = vrot.slane %v1044, 1
  %v1108 = vsel %vm311, %v1106, %v1107
  %v1109 = vrot.slane %v1045, 1
  %v1110 = vrot.slane %v1046, 1
  %v1111 = vsel %vm311, %v1109, %v1110
  %v1112 = vrot.slane %v1047, 1
  %v1113 = vrot.slane %v1048, 1
  %v1114 = vsel %vm311, %v1112, %v1113
  %v1115 = vrot.slane %v1049, 1
  %v1116 = vrot.slane %v1050, 1
  %v1117 = vsel %vm311, %v1115, %v1116
  %v1118 = vrot.slane %v1051, 1
  %v1119 = vrot.slane %v1052, 1
  %v1120 = vsel %vm311, %v1118, %v1119
  %v1121 = vrot.slane %v1053, 1
  %v1122 = vrot.slane %v1054, 1
  %v1123 = vsel %vm311, %v1121, %v1122
  %v1124 = vrot.slane %v1055, 1
  %v1125 = vrot.slane %v1056, 1
  %v1126 = vsel %vm311, %v1124, %v1125
  %v1155 = vadd.f32 %v997, %v1087
  %v1156 = vadd.f32 %v998, %v1086
  %v1157 = vadd.f32 %v999, %v1090
  %v1158 = vadd.f32 %v1000, %v1089
  %v1159 = vadd.f32 %v1001, %v1093
  %v1160 = vadd.f32 %v1002, %v1092
  %v1161 = vadd.f32 %v1003, %v1096
  %v1162 = vadd.f32 %v1004, %v1095
  %v1163 = vadd.f32 %v1005, %v1099
  %v1164 = vadd.f32 %v1006, %v1098
  %v1165 = vadd.f32 %v1007, %v1102
  %v1166 = vadd.f32 %v1008, %v1101
  %v1167 = vadd.f32 %v1009, %v1105
  %v1168 = vadd.f32 %v1010, %v1104
  %v1169 = vadd.f32 %v1011, %v1108
  %v1170 = vadd.f32 %v1012, %v1107
  %v1171 = vadd.f32 %v1013, %v1111
  %v1172 = vadd.f32 %v1014, %v1110
  %v1173 = vadd.f32 %v1015, %v1114
  %v1174 = vadd.f32 %v1016, %v1113
  %v1175 = vadd.f32 %v1017, %v1117
  %v1176 = vadd.f32 %v1018, %v1116
  %v1177 = vadd.f32 %v1019, %v1120
  %v1178 = vadd.f32 %v1020, %v1119
  %v1179 = vadd.f32 %v1021, %v1123
  %v1180 = vadd.f32 %v1022, %v1122
  %v1181 = vadd.f32 %v1023, %v1126
  %v1182 = vadd.f32 %v1024, %v1125
  %v1183 = vlaneseq
  %v1184 = vshrl.u32 %v1183, 7
  %v1185 = vsub.s32 0, %v1184
  %v1186 = vrot.slane %v50, %v1185
  %v1187 = vmul.f32 %v74, %v1186
  %v1188 = vmul.f32 %v79, %v1186
  %v1189 = vmul.f32 %v84, %v1186
  %v1190 = vmul.f32 %v89, %v1186
  %v1191 = vmul.f32 %v94, %v1186
  %v1192 = vmul.f32 %v99, %v1186
  %v1193 = vmul.f32 %v104, %v1186
  %v1194 = vmul.f32 %v109, %v1186
  %v1195 = vmul.f32 %v114, %v1186
  %v1196 = vmul.f32 %v119, %v1186
  %v1197 = vmul.f32 %v124, %v1186
  %v1198 = vmul.f32 %v129, %v1186
  %v1199 = vmul.f32 %v134, %v1186
  %v1200 = vmul.f32 %v139, %v1186
  %v1201 = vmul.f32 %v144, %v1186
  %v1202 = vmul.f32 %v149, %v1186
  %v1203 = vmul.f32 %v154, %v1186
  %v1204 = vmul.f32 %v159, %v1186
  %v1205 = vmul.f32 %v164, %v1186
  %v1206 = vmul.f32 %v169, %v1186
  %v1207 = vmul.f32 %v174, %v1186
  %v1208 = vmul.f32 %v179, %v1186
  %v1209 = vmul.f32 %v184, %v1186
  %v1210 = vmul.f32 %v189, %v1186
  %v1211 = vmul.f32 %v572, %v1186
  %v1212 = vmul.f32 %v577, %v1186
  %v1213 = vmul.f32 %v958, %v1186
  %v1214 = vmul.f32 %v963, %v1186
  %v1243 = vrot.slane %v1187, 2
  %v1244 = vrot.slane %v1188, 2
  %v1245 = vsel %vm470, %v1243, %v1244
  %v1246 = vrot.slane %v1189, 2
  %v1247 = vrot.slane %v1190, 2
  %v1248 = vsel %vm470, %v1246, %v1247
  %v1249 = vrot.slane %v1191, 2
  %v1250 = vrot.slane %v1192, 2
  %v1251 = vsel %vm470, %v1249, %v1250
  %v1252 = vrot.slane %v1193, 2
  %v1253 = vrot.slane %v1194, 2
  %v1254 = vsel %vm470, %v1252, %v1253
  %v1255 = vrot.slane %v1195, 2
  %v1256 = vrot.slane %v1196, 2
  %v1257 = vsel %vm470, %v1255, %v1256
  %v1258 = vrot.slane %v1197, 2
  %v1259 = vrot.slane %v1198, 2
  %v1260 = vsel %vm470, %v1258, %v1259
  %v1261 = vrot.slane %v1199, 2
  %v1262 = vrot.slane %v1200, 2
  %v1263 = vsel %vm470, %v1261, %v1262
  %v1264 = vrot.slane %v1201, 2
  %v1265 = vrot.slane %v1202, 2
  %v1266 = vsel %vm470, %v1264, %v1265
  %v1267 = vrot.slane %v1203, 2
  %v1268 = vrot.slane %v1204, 2
  %v1269 = vsel %vm470, %v1267, %v1268
  %v1270 = vrot.slane %v1205, 2
  %v1271 = vrot.slane %v1206, 2
  %v1272 = vsel %vm470, %v1270, %v1271
  %v1273 = vrot.slane %v1207, 2
  %v1274 = vrot.slane %v1208, 2
  %v1275 = vsel %vm470, %v1273, %v1274
  %v1276 = vrot.slane %v1209, 2
  %v1277 = vrot.slane %v1210, 2
  %v1278 = vsel %vm470, %v1276, %v1277
  %v1279 = vrot.slane %v1211, 2
  %v1280 = vrot.slane %v1212, 2
  %v1281 = vsel %vm470, %v1279, %v1280
  %v1282 = vrot.slane %v1213, 2
  %v1283 = vrot.slane %v1214, 2
  %v1284 = vsel %vm470, %v1282, %v1283
  %v1313 = vadd.f32 %v1155, %v1245
  %v1314 = vadd.f32 %v1156, %v1244
  %v1315 = vadd.f32 %v1157, %v1248
  %v1316 = vadd.f32 %v1158, %v1247
  %v1317 = vadd.f32 %v1159, %v1251
  %v1318 = vadd.f32 %v1160, %v1250
  %v1319 = vadd.f32 %v1161, %v1254
  %v1320 = vadd.f32 %v1162, %v1253
  %v1321 = vadd.f32 %v1163, %v1257
  %v1322 = vadd.f32 %v1164, %v1256
  %v1323 = vadd.f32 %v1165, %v1260
  %v1324 = vadd.f32 %v1166, %v1259
  %v1325 = vadd.f32 %v1167, %v1263
  %v1326 = vadd.f32 %v1168, %v1262
  %v1327 = vadd.f32 %v1169, %v1266
  %v1328 = vadd.f32 %v1170, %v1265
  %v1329 = vadd.f32 %v1171, %v1269
  %v1330 = vadd.f32 %v1172, %v1268
  %v1331 = vadd.f32 %v1173, %v1272
  %v1332 = vadd.f32 %v1174, %v1271
  %v1333 = vadd.f32 %v1175, %v1275
  %v1334 = vadd.f32 %v1176, %v1274
  %v1335 = vadd.f32 %v1177, %v1278
  %v1336 = vadd.f32 %v1178, %v1277
  %v1337 = vadd.f32 %v1179, %v1281
  %v1338 = vadd.f32 %v1180, %v1280
  %v1339 = vadd.f32 %v1181, %v1284
  %v1340 = vadd.f32 %v1182, %v1283
  %v1341 = vld [vmem:[%s2] sm:$0xff]
  %v1342 = vld [vmem:[%s2 + $0x8] sm:$0xff]
  %v1343 = vld [vmem:[%s2 + $0x10] sm:$0xff]
  %v1344 = vld [vmem:[%s2 + $0x18] sm:$0xff]
  %v1345 = vld [vmem:[%s2 + $0x20] sm:$0xff]
  %v1346 = vld [vmem:[%s2 + $0x28] sm:$0xff]
  %v1347 = vld [vmem:[%s2 + $0x30] sm:$0xff]
  %v1348 = vld [vmem:[%s2 + $0x38] sm:$0xff]
  %v1349 = vld [vmem:[%s2 + $0x40] sm:$0xff]
  %v1374 = vrot.slane %v1313, 1
  %v1375 = vrot.slane %v1314, 1
  %v1376 = vsel %vm311, %v1374, %v1375
  %v1377 = vrot.slane %v1315, 1
  %v1378 = vrot.slane %v1316, 1
  %v1379 = vsel %vm311, %v1377, %v1378
  %v1380 = vrot.slane %v1317, 1
  %v1381 = vrot.slane %v1318, 1
  %v1382 = vsel %vm311, %v1380, %v1381
  %v1383 = vrot.slane %v1319, 1
  %v1384 = vrot.slane %v1320, 1
  %v1385 = vsel %vm311, %v1383, %v1384
  %v1386 = vrot.slane %v1321, 1
  %v1387 = vrot.slane %v1322, 1
  %v1388 = vsel %vm311, %v1386, %v1387
  %v1389 = vrot.slane %v1323, 1
  %v1390 = vrot.slane %v1324, 1
  %v1391 = vsel %vm311, %v1389, %v1390
  %v1392 = vrot.slane %v1325, 1
  %v1393 = vrot.slane %v1326, 1
  %v1394 = vsel %vm311, %v1392, %v1393
  %v1395 = vrot.slane %v1327, 1
  %v1396 = vrot.slane %v1328, 1
  %v1397 = vsel %vm311, %v1395, %v1396
  %v1398 = vrot.slane %v1329, 1
  %v1399 = vrot.slane %v1330, 1
  %v1400 = vsel %vm311, %v1398, %v1399
  %v1401 = vrot.slane %v1331, 1
  %v1402 = vrot.slane %v1332, 1
  %v1403 = vsel %vm311, %v1401, %v1402
  %v1404 = vrot.slane %v1333, 1
  %v1405 = vrot.slane %v1334, 1
  %v1406 = vsel %vm311, %v1404, %v1405
  %v1407 = vrot.slane %v1335, 1
  %v1408 = vrot.slane %v1336, 1
  %v1409 = vsel %vm311, %v1407, %v1408
  %1410 = vrot.lane.b32.xlu0 %v1376, 8
  %v1411 = vpop.permute.xlu0 %1410
  %1412 = vrot.lane.b32.xlu0 %v1375, 8
  %v1413 = vpop.permute.xlu0 %1412
  %1414 = vrot.lane.b32.xlu0 %v1379, 8
  %v1415 = vpop.permute.xlu0 %1414
  %1416 = vrot.lane.b32.xlu0 %v1378, 8
  %v1417 = vpop.permute.xlu0 %1416
  %1418 = vrot.lane.b32.xlu0 %v1382, 8
  %v1419 = vpop.permute.xlu0 %1418
  %1420 = vrot.lane.b32.xlu0 %v1381, 8
  %v1421 = vpop.permute.xlu0 %1420
  %1422 = vrot.lane.b32.xlu0 %v1385, 8
  %v1423 = vpop.permute.xlu0 %1422
  %1424 = vrot.lane.b32.xlu0 %v1384, 8
  %v1425 = vpop.permute.xlu0 %1424
  %1426 = vrot.lane.b32.xlu0 %v1388, 8
  %v1427 = vpop.permute.xlu0 %1426
  %1428 = vrot.lane.b32.xlu0 %v1387, 8
  %v1429 = vpop.permute.xlu0 %1428
  %1430 = vrot.lane.b32.xlu0 %v1391, 8
  %v1431 = vpop.permute.xlu0 %1430
  %1432 = vrot.lane.b32.xlu0 %v1390, 8
  %v1433 = vpop.permute.xlu0 %1432
  %1434 = vrot.lane.b32.xlu0 %v1394, 8
  %v1435 = vpop.permute.xlu0 %1434
  %1436 = vrot.lane.b32.xlu0 %v1393, 8
  %v1437 = vpop.permute.xlu0 %1436
  %1438 = vrot.lane.b32.xlu0 %v1397, 8
  %v1439 = vpop.permute.xlu0 %1438
  %1440 = vrot.lane.b32.xlu0 %v1396, 8
  %v1441 = vpop.permute.xlu0 %1440
  %1442 = vrot.lane.b32.xlu0 %v1400, 8
  %v1443 = vpop.permute.xlu0 %1442
  %1444 = vrot.lane.b32.xlu0 %v1399, 8
  %v1445 = vpop.permute.xlu0 %1444
  %1446 = vrot.lane.b32.xlu0 %v1403, 8
  %v1447 = vpop.permute.xlu0 %1446
  %1448 = vrot.lane.b32.xlu0 %v1402, 8
  %v1449 = vpop.permute.xlu0 %1448
  %1450 = vrot.lane.b32.xlu0 %v1406, 8
  %v1451 = vpop.permute.xlu0 %1450
  %1452 = vrot.lane.b32.xlu0 %v1405, 8
  %v1453 = vpop.permute.xlu0 %1452
  %1454 = vrot.lane.b32.xlu0 %v1409, 8
  %v1455 = vpop.permute.xlu0 %1454
  %1456 = vrot.lane.b32.xlu0 %v1408, 8
  %v1457 = vpop.permute.xlu0 %1456
  %v1482 = vrot.slane %v1313, 2
  %v1483 = vrot.slane %v1314, 2
  %v1484 = vsel %vm470, %v1482, %v1483
  %v1485 = vrot.slane %v1315, 2
  %v1486 = vrot.slane %v1316, 2
  %v1487 = vsel %vm470, %v1485, %v1486
  %v1488 = vrot.slane %v1317, 2
  %v1489 = vrot.slane %v1318, 2
  %v1490 = vsel %vm470, %v1488, %v1489
  %v1491 = vrot.slane %v1319, 2
  %v1492 = vrot.slane %v1320, 2
  %v1493 = vsel %vm470, %v1491, %v1492
  %v1494 = vrot.slane %v1321, 2
  %v1495 = vrot.slane %v1322, 2
  %v1496 = vsel %vm470, %v1494, %v1495
  %v1497 = vrot.slane %v1323, 2
  %v1498 = vrot.slane %v1324, 2
  %v1499 = vsel %vm470, %v1497, %v1498
  %v1500 = vrot.slane %v1325, 2
  %v1501 = vrot.slane %v1326, 2
  %v1502 = vsel %vm470, %v1500, %v1501
  %v1503 = vrot.slane %v1327, 2
  %v1504 = vrot.slane %v1328, 2
  %v1505 = vsel %vm470, %v1503, %v1504
  %v1506 = vrot.slane %v1329, 2
  %v1507 = vrot.slane %v1330, 2
  %v1508 = vsel %vm470, %v1506, %v1507
  %v1509 = vrot.slane %v1331, 2
  %v1510 = vrot.slane %v1332, 2
  %v1511 = vsel %vm470, %v1509, %v1510
  %v1512 = vrot.slane %v1333, 2
  %v1513 = vrot.slane %v1334, 2
  %v1514 = vsel %vm470, %v1512, %v1513
  %v1515 = vrot.slane %v1335, 2
  %v1516 = vrot.slane %v1336, 2
  %v1517 = vsel %vm470, %v1515, %v1516
  %1518 = vrot.lane.b32.xlu0 %v1484, 16
  %v1519 = vpop.permute.xlu0 %1518
  %1520 = vrot.lane.b32.xlu0 %v1483, 16
  %v1521 = vpop.permute.xlu0 %1520
  %1522 = vrot.lane.b32.xlu0 %v1487, 16
  %v1523 = vpop.permute.xlu0 %1522
  %1524 = vrot.lane.b32.xlu0 %v1486, 16
  %v1525 = vpop.permute.xlu0 %1524
  %1526 = vrot.lane.b32.xlu0 %v1490, 16
  %v1527 = vpop.permute.xlu0 %1526
  %1528 = vrot.lane.b32.xlu0 %v1489, 16
  %v1529 = vpop.permute.xlu0 %1528
  %1530 = vrot.lane.b32.xlu0 %v1493, 16
  %v1531 = vpop.permute.xlu0 %1530
  %1532 = vrot.lane.b32.xlu0 %v1492, 16
  %v1533 = vpop.permute.xlu0 %1532
  %1534 = vrot.lane.b32.xlu0 %v1496, 16
  %v1535 = vpop.permute.xlu0 %1534
  %1536 = vrot.lane.b32.xlu0 %v1495, 16
  %v1537 = vpop.permute.xlu0 %1536
  %1538 = vrot.lane.b32.xlu0 %v1499, 16
  %v1539 = vpop.permute.xlu0 %1538
  %1540 = vrot.lane.b32.xlu0 %v1498, 16
  %v1541 = vpop.permute.xlu0 %1540
  %1542 = vrot.lane.b32.xlu0 %v1502, 16
  %v1543 = vpop.permute.xlu0 %1542
  %1544 = vrot.lane.b32.xlu0 %v1501, 16
  %v1545 = vpop.permute.xlu0 %1544
  %1546 = vrot.lane.b32.xlu0 %v1505, 16
  %v1547 = vpop.permute.xlu0 %1546
  %1548 = vrot.lane.b32.xlu0 %v1504, 16
  %v1549 = vpop.permute.xlu0 %1548
  %1550 = vrot.lane.b32.xlu0 %v1508, 16
  %v1551 = vpop.permute.xlu0 %1550
  %1552 = vrot.lane.b32.xlu0 %v1507, 16
  %v1553 = vpop.permute.xlu0 %1552
  %1554 = vrot.lane.b32.xlu0 %v1511, 16
  %v1555 = vpop.permute.xlu0 %1554
  %1556 = vrot.lane.b32.xlu0 %v1510, 16
  %v1557 = vpop.permute.xlu0 %1556
  %1558 = vrot.lane.b32.xlu0 %v1514, 16
  %v1559 = vpop.permute.xlu0 %1558
  %1560 = vrot.lane.b32.xlu0 %v1513, 16
  %v1561 = vpop.permute.xlu0 %1560
  %1562 = vrot.lane.b32.xlu0 %v1517, 16
  %v1563 = vpop.permute.xlu0 %1562
  %1564 = vrot.lane.b32.xlu0 %v1516, 16
  %v1565 = vpop.permute.xlu0 %1564
  %1592 = vrot.lane.b32.xlu0 %v1315, 24
  %v1593 = vpop.permute.xlu0 %1592
  %1594 = vrot.lane.b32.xlu0 %v1316, 24
  %v1595 = vpop.permute.xlu0 %1594
  %1596 = vrot.lane.b32.xlu0 %v1317, 24
  %v1597 = vpop.permute.xlu0 %1596
  %1598 = vrot.lane.b32.xlu0 %v1318, 24
  %v1599 = vpop.permute.xlu0 %1598
  %1600 = vrot.lane.b32.xlu0 %v1319, 24
  %v1601 = vpop.permute.xlu0 %1600
  %1602 = vrot.lane.b32.xlu0 %v1320, 24
  %v1603 = vpop.permute.xlu0 %1602
  %1604 = vrot.lane.b32.xlu0 %v1321, 24
  %v1605 = vpop.permute.xlu0 %1604
  %1606 = vrot.lane.b32.xlu0 %v1322, 24
  %v1607 = vpop.permute.xlu0 %1606
  %1608 = vrot.lane.b32.xlu0 %v1323, 24
  %v1609 = vpop.permute.xlu0 %1608
  %1610 = vrot.lane.b32.xlu0 %v1324, 24
  %v1611 = vpop.permute.xlu0 %1610
  %1612 = vrot.lane.b32.xlu0 %v1325, 24
  %v1613 = vpop.permute.xlu0 %1612
  %1614 = vrot.lane.b32.xlu0 %v1326, 24
  %v1615 = vpop.permute.xlu0 %1614
  %1616 = vrot.lane.b32.xlu0 %v1327, 24
  %v1617 = vpop.permute.xlu0 %1616
  %1618 = vrot.lane.b32.xlu0 %v1328, 24
  %v1619 = vpop.permute.xlu0 %1618
  %1620 = vrot.lane.b32.xlu0 %v1329, 24
  %v1621 = vpop.permute.xlu0 %1620
  %1622 = vrot.lane.b32.xlu0 %v1330, 24
  %v1623 = vpop.permute.xlu0 %1622
  %1624 = vrot.lane.b32.xlu0 %v1331, 24
  %v1625 = vpop.permute.xlu0 %1624
  %1626 = vrot.lane.b32.xlu0 %v1332, 24
  %v1627 = vpop.permute.xlu0 %1626
  %1628 = vrot.lane.b32.xlu0 %v1333, 24
  %v1629 = vpop.permute.xlu0 %1628
  %1630 = vrot.lane.b32.xlu0 %v1334, 24
  %v1631 = vpop.permute.xlu0 %1630
  %1632 = vrot.lane.b32.xlu0 %v1335, 24
  %v1633 = vpop.permute.xlu0 %1632
  %1634 = vrot.lane.b32.xlu0 %v1336, 24
  %v1635 = vpop.permute.xlu0 %1634
  %1636 = vrot.lane.b32.xlu0 %v1337, 24
  %v1637 = vpop.permute.xlu0 %1636
  %1638 = vrot.lane.b32.xlu0 %v1338, 24
  %v1639 = vpop.permute.xlu0 %1638
  %v1664 = vrot.slane %v1337, 1
  %v1665 = vrot.slane %v1338, 1
  %v1666 = vsel %vm311, %v1664, %v1665
  %1667 = vrot.lane.b32.xlu0 %v1379, 32
  %v1668 = vpop.permute.xlu0 %1667
  %1669 = vrot.lane.b32.xlu0 %v1378, 32
  %v1670 = vpop.permute.xlu0 %1669
  %1671 = vrot.lane.b32.xlu0 %v1382, 32
  %v1672 = vpop.permute.xlu0 %1671
  %1673 = vrot.lane.b32.xlu0 %v1381, 32
  %v1674 = vpop.permute.xlu0 %1673
  %1675 = vrot.lane.b32.xlu0 %v1385, 32
  %v1676 = vpop.permute.xlu0 %1675
  %1677 = vrot.lane.b32.xlu0 %v1384, 32
  %v1678 = vpop.permute.xlu0 %1677
  %1679 = vrot.lane.b32.xlu0 %v1388, 32
  %v1680 = vpop.permute.xlu0 %1679
  %1681 = vrot.lane.b32.xlu0 %v1387, 32
  %v1682 = vpop.permute.xlu0 %1681
  %1683 = vrot.lane.b32.xlu0 %v1391, 32
  %v1684 = vpop.permute.xlu0 %1683
  %1685 = vrot.lane.b32.xlu0 %v1390, 32
  %v1686 = vpop.permute.xlu0 %1685
  %1687 = vrot.lane.b32.xlu0 %v1394, 32
  %v1688 = vpop.permute.xlu0 %1687
  %1689 = vrot.lane.b32.xlu0 %v1393, 32
  %v1690 = vpop.permute.xlu0 %1689
  %1691 = vrot.lane.b32.xlu0 %v1397, 32
  %v1692 = vpop.permute.xlu0 %1691
  %1693 = vrot.lane.b32.xlu0 %v1396, 32
  %v1694 = vpop.permute.xlu0 %1693
  %1695 = vrot.lane.b32.xlu0 %v1400, 32
  %v1696 = vpop.permute.xlu0 %1695
  %1697 = vrot.lane.b32.xlu0 %v1399, 32
  %v1698 = vpop.permute.xlu0 %1697
  %1699 = vrot.lane.b32.xlu0 %v1403, 32
  %v1700 = vpop.permute.xlu0 %1699
  %1701 = vrot.lane.b32.xlu0 %v1402, 32
  %v1702 = vpop.permute.xlu0 %1701
  %1703 = vrot.lane.b32.xlu0 %v1406, 32
  %v1704 = vpop.permute.xlu0 %1703
  %1705 = vrot.lane.b32.xlu0 %v1405, 32
  %v1706 = vpop.permute.xlu0 %1705
  %1707 = vrot.lane.b32.xlu0 %v1409, 32
  %v1708 = vpop.permute.xlu0 %1707
  %1709 = vrot.lane.b32.xlu0 %v1408, 32
  %v1710 = vpop.permute.xlu0 %1709
  %1711 = vrot.lane.b32.xlu0 %v1666, 32
  %v1712 = vpop.permute.xlu0 %1711
  %1713 = vrot.lane.b32.xlu0 %v1665, 32
  %v1714 = vpop.permute.xlu0 %1713
  %v1739 = vrot.slane %v1337, 2
  %v1740 = vrot.slane %v1338, 2
  %v1741 = vsel %vm470, %v1739, %v1740
  %1742 = vrot.lane.b32.xlu0 %v1487, 40
  %v1743 = vpop.permute.xlu0 %1742
  %1744 = vrot.lane.b32.xlu0 %v1486, 40
  %v1745 = vpop.permute.xlu0 %1744
  %1746 = vrot.lane.b32.xlu0 %v1490, 40
  %v1747 = vpop.permute.xlu0 %1746
  %1748 = vrot.lane.b32.xlu0 %v1489, 40
  %v1749 = vpop.permute.xlu0 %1748
  %1750 = vrot.lane.b32.xlu0 %v1493, 40
  %v1751 = vpop.permute.xlu0 %1750
  %1752 = vrot.lane.b32.xlu0 %v1492, 40
  %v1753 = vpop.permute.xlu0 %1752
  %1754 = vrot.lane.b32.xlu0 %v1496, 40
  %v1755 = vpop.permute.xlu0 %1754
  %1756 = vrot.lane.b32.xlu0 %v1495, 40
  %v1757 = vpop.permute.xlu0 %1756
  %1758 = vrot.lane.b32.xlu0 %v1499, 40
  %v1759 = vpop.permute.xlu0 %1758
  %1760 = vrot.lane.b32.xlu0 %v1498, 40
  %v1761 = vpop.permute.xlu0 %1760
  %1762 = vrot.lane.b32.xlu0 %v1502, 40
  %v1763 = vpop.permute.xlu0 %1762
  %1764 = vrot.lane.b32.xlu0 %v1501, 40
  %v1765 = vpop.permute.xlu0 %1764
  %1766 = vrot.lane.b32.xlu0 %v1505, 40
  %v1767 = vpop.permute.xlu0 %1766
  %1768 = vrot.lane.b32.xlu0 %v1504, 40
  %v1769 = vpop.permute.xlu0 %1768
  %1770 = vrot.lane.b32.xlu0 %v1508, 40
  %v1771 = vpop.permute.xlu0 %1770
  %1772 = vrot.lane.b32.xlu0 %v1507, 40
  %v1773 = vpop.permute.xlu0 %1772
  %1774 = vrot.lane.b32.xlu0 %v1511, 40
  %v1775 = vpop.permute.xlu0 %1774
  %1776 = vrot.lane.b32.xlu0 %v1510, 40
  %v1777 = vpop.permute.xlu0 %1776
  %1778 = vrot.lane.b32.xlu0 %v1514, 40
  %v1779 = vpop.permute.xlu0 %1778
  %1780 = vrot.lane.b32.xlu0 %v1513, 40
  %v1781 = vpop.permute.xlu0 %1780
  %1782 = vrot.lane.b32.xlu0 %v1517, 40
  %v1783 = vpop.permute.xlu0 %1782
  %1784 = vrot.lane.b32.xlu0 %v1516, 40
  %v1785 = vpop.permute.xlu0 %1784
  %1786 = vrot.lane.b32.xlu0 %v1741, 40
  %v1787 = vpop.permute.xlu0 %1786
  %1788 = vrot.lane.b32.xlu0 %v1740, 40
  %v1789 = vpop.permute.xlu0 %1788
  %1816 = vrot.lane.b32.xlu0 %v1317, 48
  %v1817 = vpop.permute.xlu0 %1816
  %1818 = vrot.lane.b32.xlu0 %v1318, 48
  %v1819 = vpop.permute.xlu0 %1818
  %1820 = vrot.lane.b32.xlu0 %v1319, 48
  %v1821 = vpop.permute.xlu0 %1820
  %1822 = vrot.lane.b32.xlu0 %v1320, 48
  %v1823 = vpop.permute.xlu0 %1822
  %1824 = vrot.lane.b32.xlu0 %v1321, 48
  %v1825 = vpop.permute.xlu0 %1824
  %1826 = vrot.lane.b32.xlu0 %v1322, 48
  %v1827 = vpop.permute.xlu0 %1826
  %1828 = vrot.lane.b32.xlu0 %v1323, 48
  %v1829 = vpop.permute.xlu0 %1828
  %1830 = vrot.lane.b32.xlu0 %v1324, 48
  %v1831 = vpop.permute.xlu0 %1830
  %1832 = vrot.lane.b32.xlu0 %v1325, 48
  %v1833 = vpop.permute.xlu0 %1832
  %1834 = vrot.lane.b32.xlu0 %v1326, 48
  %v1835 = vpop.permute.xlu0 %1834
  %1836 = vrot.lane.b32.xlu0 %v1327, 48
  %v1837 = vpop.permute.xlu0 %1836
  %1838 = vrot.lane.b32.xlu0 %v1328, 48
  %v1839 = vpop.permute.xlu0 %1838
  %1840 = vrot.lane.b32.xlu0 %v1329, 48
  %v1841 = vpop.permute.xlu0 %1840
  %1842 = vrot.lane.b32.xlu0 %v1330, 48
  %v1843 = vpop.permute.xlu0 %1842
  %1844 = vrot.lane.b32.xlu0 %v1331, 48
  %v1845 = vpop.permute.xlu0 %1844
  %1846 = vrot.lane.b32.xlu0 %v1332, 48
  %v1847 = vpop.permute.xlu0 %1846
  %1848 = vrot.lane.b32.xlu0 %v1333, 48
  %v1849 = vpop.permute.xlu0 %1848
  %1850 = vrot.lane.b32.xlu0 %v1334, 48
  %v1851 = vpop.permute.xlu0 %1850
  %1852 = vrot.lane.b32.xlu0 %v1335, 48
  %v1853 = vpop.permute.xlu0 %1852
  %1854 = vrot.lane.b32.xlu0 %v1336, 48
  %v1855 = vpop.permute.xlu0 %1854
  %1856 = vrot.lane.b32.xlu0 %v1337, 48
  %v1857 = vpop.permute.xlu0 %1856
  %1858 = vrot.lane.b32.xlu0 %v1338, 48
  %v1859 = vpop.permute.xlu0 %1858
  %1860 = vrot.lane.b32.xlu0 %v1339, 48
  %v1861 = vpop.permute.xlu0 %1860
  %1862 = vrot.lane.b32.xlu0 %v1340, 48
  %v1863 = vpop.permute.xlu0 %1862
  %v1888 = vrot.slane %v1339, 1
  %v1889 = vrot.slane %v1340, 1
  %v1890 = vsel %vm311, %v1888, %v1889
  %1891 = vrot.lane.b32.xlu0 %v1382, 56
  %v1892 = vpop.permute.xlu0 %1891
  %1893 = vrot.lane.b32.xlu0 %v1381, 56
  %v1894 = vpop.permute.xlu0 %1893
  %1895 = vrot.lane.b32.xlu0 %v1385, 56
  %v1896 = vpop.permute.xlu0 %1895
  %1897 = vrot.lane.b32.xlu0 %v1384, 56
  %v1898 = vpop.permute.xlu0 %1897
  %1899 = vrot.lane.b32.xlu0 %v1388, 56
  %v1900 = vpop.permute.xlu0 %1899
  %1901 = vrot.lane.b32.xlu0 %v1387, 56
  %v1902 = vpop.permute.xlu0 %1901
  %1903 = vrot.lane.b32.xlu0 %v1391, 56
  %v1904 = vpop.permute.xlu0 %1903
  %1905 = vrot.lane.b32.xlu0 %v1390, 56
  %v1906 = vpop.permute.xlu0 %1905
  %1907 = vrot.lane.b32.xlu0 %v1394, 56
  %v1908 = vpop.permute.xlu0 %1907
  %1909 = vrot.lane.b32.xlu0 %v1393, 56
  %v1910 = vpop.permute.xlu0 %1909
  %1911 = vrot.lane.b32.xlu0 %v1397, 56
  %v1912 = vpop.permute.xlu0 %1911
  %1913 = vrot.lane.b32.xlu0 %v1396, 56
  %v1914 = vpop.permute.xlu0 %1913
  %1915 = vrot.lane.b32.xlu0 %v1400, 56
  %v1916 = vpop.permute.xlu0 %1915
  %1917 = vrot.lane.b32.xlu0 %v1399, 56
  %v1918 = vpop.permute.xlu0 %1917
  %1919 = vrot.lane.b32.xlu0 %v1403, 56
  %v1920 = vpop.permute.xlu0 %1919
  %1921 = vrot.lane.b32.xlu0 %v1402, 56
  %v1922 = vpop.permute.xlu0 %1921
  %1923 = vrot.lane.b32.xlu0 %v1406, 56
  %v1924 = vpop.permute.xlu0 %1923
  %1925 = vrot.lane.b32.xlu0 %v1405, 56
  %v1926 = vpop.permute.xlu0 %1925
  %1927 = vrot.lane.b32.xlu0 %v1409, 56
  %v1928 = vpop.permute.xlu0 %1927
  %1929 = vrot.lane.b32.xlu0 %v1408, 56
  %v1930 = vpop.permute.xlu0 %1929
  %1931 = vrot.lane.b32.xlu0 %v1666, 56
  %v1932 = vpop.permute.xlu0 %1931
  %1933 = vrot.lane.b32.xlu0 %v1665, 56
  %v1934 = vpop.permute.xlu0 %1933
  %1935 = vrot.lane.b32.xlu0 %v1890, 56
  %v1936 = vpop.permute.xlu0 %1935
  %1937 = vrot.lane.b32.xlu0 %v1889, 56
  %v1938 = vpop.permute.xlu0 %1937
  %v1963 = vrot.slane %v1339, 2
  %v1964 = vrot.slane %v1340, 2
  %v1965 = vsel %vm470, %v1963, %v1964
  %1966 = vrot.lane.b32.xlu0 %v1490, 64
  %v1967 = vpop.permute.xlu0 %1966
  %1968 = vrot.lane.b32.xlu0 %v1489, 64
  %v1969 = vpop.permute.xlu0 %1968
  %1970 = vrot.lane.b32.xlu0 %v1493, 64
  %v1971 = vpop.permute.xlu0 %1970
  %1972 = vrot.lane.b32.xlu0 %v1492, 64
  %v1973 = vpop.permute.xlu0 %1972
  %1974 = vrot.lane.b32.xlu0 %v1496, 64
  %v1975 = vpop.permute.xlu0 %1974
  %1976 = vrot.lane.b32.xlu0 %v1495, 64
  %v1977 = vpop.permute.xlu0 %1976
  %1978 = vrot.lane.b32.xlu0 %v1499, 64
  %v1979 = vpop.permute.xlu0 %1978
  %1980 = vrot.lane.b32.xlu0 %v1498, 64
  %v1981 = vpop.permute.xlu0 %1980
  %1982 = vrot.lane.b32.xlu0 %v1502, 64
  %v1983 = vpop.permute.xlu0 %1982
  %1984 = vrot.lane.b32.xlu0 %v1501, 64
  %v1985 = vpop.permute.xlu0 %1984
  %1986 = vrot.lane.b32.xlu0 %v1505, 64
  %v1987 = vpop.permute.xlu0 %1986
  %1988 = vrot.lane.b32.xlu0 %v1504, 64
  %v1989 = vpop.permute.xlu0 %1988
  %1990 = vrot.lane.b32.xlu0 %v1508, 64
  %v1991 = vpop.permute.xlu0 %1990
  %1992 = vrot.lane.b32.xlu0 %v1507, 64
  %v1993 = vpop.permute.xlu0 %1992
  %1994 = vrot.lane.b32.xlu0 %v1511, 64
  %v1995 = vpop.permute.xlu0 %1994
  %1996 = vrot.lane.b32.xlu0 %v1510, 64
  %v1997 = vpop.permute.xlu0 %1996
  %1998 = vrot.lane.b32.xlu0 %v1514, 64
  %v1999 = vpop.permute.xlu0 %1998
  %2000 = vrot.lane.b32.xlu0 %v1513, 64
  %v2001 = vpop.permute.xlu0 %2000
  %2002 = vrot.lane.b32.xlu0 %v1517, 64
  %v2003 = vpop.permute.xlu0 %2002
  %2004 = vrot.lane.b32.xlu0 %v1516, 64
  %v2005 = vpop.permute.xlu0 %2004
  %2006 = vrot.lane.b32.xlu0 %v1741, 64
  %v2007 = vpop.permute.xlu0 %2006
  %2008 = vrot.lane.b32.xlu0 %v1740, 64
  %v2009 = vpop.permute.xlu0 %2008
  %2010 = vrot.lane.b32.xlu0 %v1965, 64
  %v2011 = vpop.permute.xlu0 %2010
  %2012 = vrot.lane.b32.xlu0 %v1964, 64
  %v2013 = vpop.permute.xlu0 %2012
  %vm2038 = vcmask 64512
  %v2039 = vsel %vm2038, %v1313, %v1411
  %v2040 = vsel %vm2038, %v1314, %v1413
  %v2041 = vsel %vm2038, %v1315, %v1415
  %v2042 = vsel %vm2038, %v1316, %v1417
  %v2043 = vsel %vm2038, %v1317, %v1419
  %v2044 = vsel %vm2038, %v1318, %v1421
  %v2045 = vsel %vm2038, %v1319, %v1423
  %v2046 = vsel %vm2038, %v1320, %v1425
  %v2047 = vsel %vm2038, %v1321, %v1427
  %v2048 = vsel %vm2038, %v1322, %v1429
  %v2049 = vsel %vm2038, %v1323, %v1431
  %v2050 = vsel %vm2038, %v1324, %v1433
  %v2051 = vsel %vm2038, %v1325, %v1435
  %v2052 = vsel %vm2038, %v1326, %v1437
  %v2053 = vsel %vm2038, %v1327, %v1439
  %v2054 = vsel %vm2038, %v1328, %v1441
  %v2055 = vsel %vm2038, %v1329, %v1443
  %v2056 = vsel %vm2038, %v1330, %v1445
  %v2057 = vsel %vm2038, %v1331, %v1447
  %v2058 = vsel %vm2038, %v1332, %v1449
  %v2059 = vsel %vm2038, %v1333, %v1451
  %v2060 = vsel %vm2038, %v1334, %v1453
  %v2061 = vsel %vm2038, %v1335, %v1455
  %v2062 = vsel %vm2038, %v1336, %v1457
  %vm2063 = vcmask 130048
  %v2064 = vsel %vm2063, %v2039, %v1519
  %v2065 = vsel %vm2063, %v2040, %v1521
  %v2066 = vsel %vm2063, %v2041, %v1523
  %v2067 = vsel %vm2063, %v2042, %v1525
  %v2068 = vsel %vm2063, %v2043, %v1527
  %v2069 = vsel %vm2063, %v2044, %v1529
  %v2070 = vsel %vm2063, %v2045, %v1531
  %v2071 = vsel %vm2063, %v2046, %v1533
  %v2072 = vsel %vm2063, %v2047, %v1535
  %v2073 = vsel %vm2063, %v2048, %v1537
  %v2074 = vsel %vm2063, %v2049, %v1539
  %v2075 = vsel %vm2063, %v2050, %v1541
  %v2076 = vsel %vm2063, %v2051, %v1543
  %v2077 = vsel %vm2063, %v2052, %v1545
  %v2078 = vsel %vm2063, %v2053, %v1547
  %v2079 = vsel %vm2063, %v2054, %v1549
  %v2080 = vsel %vm2063, %v2055, %v1551
  %v2081 = vsel %vm2063, %v2056, %v1553
  %v2082 = vsel %vm2063, %v2057, %v1555
  %v2083 = vsel %vm2063, %v2058, %v1557
  %v2084 = vsel %vm2063, %v2059, %v1559
  %v2085 = vsel %vm2063, %v2060, %v1561
  %v2086 = vsel %vm2063, %v2061, %v1563
  %v2087 = vsel %vm2063, %v2062, %v1565
  %vm2088 = vcmask 195584
  %v2089 = vsel %vm2088, %v2064, %v1593
  %v2090 = vsel %vm2088, %v2065, %v1595
  %v2091 = vsel %vm2088, %v2066, %v1597
  %v2092 = vsel %vm2088, %v2067, %v1599
  %v2093 = vsel %vm2088, %v2068, %v1601
  %v2094 = vsel %vm2088, %v2069, %v1603
  %v2095 = vsel %vm2088, %v2070, %v1605
  %v2096 = vsel %vm2088, %v2071, %v1607
  %v2097 = vsel %vm2088, %v2072, %v1609
  %v2098 = vsel %vm2088, %v2073, %v1611
  %v2099 = vsel %vm2088, %v2074, %v1613
  %v2100 = vsel %vm2088, %v2075, %v1615
  %v2101 = vsel %vm2088, %v2076, %v1617
  %v2102 = vsel %vm2088, %v2077, %v1619
  %v2103 = vsel %vm2088, %v2078, %v1621
  %v2104 = vsel %vm2088, %v2079, %v1623
  %v2105 = vsel %vm2088, %v2080, %v1625
  %v2106 = vsel %vm2088, %v2081, %v1627
  %v2107 = vsel %vm2088, %v2082, %v1629
  %v2108 = vsel %vm2088, %v2083, %v1631
  %v2109 = vsel %vm2088, %v2084, %v1633
  %v2110 = vsel %vm2088, %v2085, %v1635
  %v2111 = vsel %vm2088, %v2086, %v1637
  %v2112 = vsel %vm2088, %v2087, %v1639
  %vm2113 = vcmask 261120
  %v2114 = vsel %vm2113, %v2089, %v1668
  %v2115 = vsel %vm2113, %v2090, %v1670
  %v2116 = vsel %vm2113, %v2091, %v1672
  %v2117 = vsel %vm2113, %v2092, %v1674
  %v2118 = vsel %vm2113, %v2093, %v1676
  %v2119 = vsel %vm2113, %v2094, %v1678
  %v2120 = vsel %vm2113, %v2095, %v1680
  %v2121 = vsel %vm2113, %v2096, %v1682
  %v2122 = vsel %vm2113, %v2097, %v1684
  %v2123 = vsel %vm2113, %v2098, %v1686
  %v2124 = vsel %vm2113, %v2099, %v1688
  %v2125 = vsel %vm2113, %v2100, %v1690
  %v2126 = vsel %vm2113, %v2101, %v1692
  %v2127 = vsel %vm2113, %v2102, %v1694
  %v2128 = vsel %vm2113, %v2103, %v1696
  %v2129 = vsel %vm2113, %v2104, %v1698
  %v2130 = vsel %vm2113, %v2105, %v1700
  %v2131 = vsel %vm2113, %v2106, %v1702
  %v2132 = vsel %vm2113, %v2107, %v1704
  %v2133 = vsel %vm2113, %v2108, %v1706
  %v2134 = vsel %vm2113, %v2109, %v1708
  %v2135 = vsel %vm2113, %v2110, %v1710
  %v2136 = vsel %vm2113, %v2111, %v1712
  %v2137 = vsel %vm2113, %v2112, %v1714
  %vm2138 = vcmask 326656
  %v2139 = vsel %vm2138, %v2114, %v1743
  %v2140 = vsel %vm2138, %v2115, %v1745
  %v2141 = vsel %vm2138, %v2116, %v1747
  %v2142 = vsel %vm2138, %v2117, %v1749
  %v2143 = vsel %vm2138, %v2118, %v1751
  %v2144 = vsel %vm2138, %v2119, %v1753
  %v2145 = vsel %vm2138, %v2120, %v1755
  %v2146 = vsel %vm2138, %v2121, %v1757
  %v2147 = vsel %vm2138, %v2122, %v1759
  %v2148 = vsel %vm2138, %v2123, %v1761
  %v2149 = vsel %vm2138, %v2124, %v1763
  %v2150 = vsel %vm2138, %v2125, %v1765
  %v2151 = vsel %vm2138, %v2126, %v1767
  %v2152 = vsel %vm2138, %v2127, %v1769
  %v2153 = vsel %vm2138, %v2128, %v1771
  %v2154 = vsel %vm2138, %v2129, %v1773
  %v2155 = vsel %vm2138, %v2130, %v1775
  %v2156 = vsel %vm2138, %v2131, %v1777
  %v2157 = vsel %vm2138, %v2132, %v1779
  %v2158 = vsel %vm2138, %v2133, %v1781
  %v2159 = vsel %vm2138, %v2134, %v1783
  %v2160 = vsel %vm2138, %v2135, %v1785
  %v2161 = vsel %vm2138, %v2136, %v1787
  %v2162 = vsel %vm2138, %v2137, %v1789
  %vm2163 = vcmask 392192
  %v2164 = vsel %vm2163, %v2139, %v1817
  %v2165 = vsel %vm2163, %v2140, %v1819
  %v2166 = vsel %vm2163, %v2141, %v1821
  %v2167 = vsel %vm2163, %v2142, %v1823
  %v2168 = vsel %vm2163, %v2143, %v1825
  %v2169 = vsel %vm2163, %v2144, %v1827
  %v2170 = vsel %vm2163, %v2145, %v1829
  %v2171 = vsel %vm2163, %v2146, %v1831
  %v2172 = vsel %vm2163, %v2147, %v1833
  %v2173 = vsel %vm2163, %v2148, %v1835
  %v2174 = vsel %vm2163, %v2149, %v1837
  %v2175 = vsel %vm2163, %v2150, %v1839
  %v2176 = vsel %vm2163, %v2151, %v1841
  %v2177 = vsel %vm2163, %v2152, %v1843
  %v2178 = vsel %vm2163, %v2153, %v1845
  %v2179 = vsel %vm2163, %v2154, %v1847
  %v2180 = vsel %vm2163, %v2155, %v1849
  %v2181 = vsel %vm2163, %v2156, %v1851
  %v2182 = vsel %vm2163, %v2157, %v1853
  %v2183 = vsel %vm2163, %v2158, %v1855
  %v2184 = vsel %vm2163, %v2159, %v1857
  %v2185 = vsel %vm2163, %v2160, %v1859
  %v2186 = vsel %vm2163, %v2161, %v1861
  %v2187 = vsel %vm2163, %v2162, %v1863
  %vm2188 = vcmask 457728
  %v2189 = vsel %vm2188, %v2164, %v1892
  %v2190 = vsel %vm2188, %v2165, %v1894
  %v2191 = vsel %vm2188, %v2166, %v1896
  %v2192 = vsel %vm2188, %v2167, %v1898
  %v2193 = vsel %vm2188, %v2168, %v1900
  %v2194 = vsel %vm2188, %v2169, %v1902
  %v2195 = vsel %vm2188, %v2170, %v1904
  %v2196 = vsel %vm2188, %v2171, %v1906
  %v2197 = vsel %vm2188, %v2172, %v1908
  %v2198 = vsel %vm2188, %v2173, %v1910
  %v2199 = vsel %vm2188, %v2174, %v1912
  %v2200 = vsel %vm2188, %v2175, %v1914
  %v2201 = vsel %vm2188, %v2176, %v1916
  %v2202 = vsel %vm2188, %v2177, %v1918
  %v2203 = vsel %vm2188, %v2178, %v1920
  %v2204 = vsel %vm2188, %v2179, %v1922
  %v2205 = vsel %vm2188, %v2180, %v1924
  %v2206 = vsel %vm2188, %v2181, %v1926
  %v2207 = vsel %vm2188, %v2182, %v1928
  %v2208 = vsel %vm2188, %v2183, %v1930
  %v2209 = vsel %vm2188, %v2184, %v1932
  %v2210 = vsel %vm2188, %v2185, %v1934
  %v2211 = vsel %vm2188, %v2186, %v1936
  %v2212 = vsel %vm2188, %v2187, %v1938
  %vm2213 = vcmask 523264
  %v2214 = vsel %vm2213, %v2189, %v1967
  %v2215 = vsel %vm2213, %v2190, %v1969
  %v2216 = vsel %vm2213, %v2191, %v1971
  %v2217 = vsel %vm2213, %v2192, %v1973
  %v2218 = vsel %vm2213, %v2193, %v1975
  %v2219 = vsel %vm2213, %v2194, %v1977
  %v2220 = vsel %vm2213, %v2195, %v1979
  %v2221 = vsel %vm2213, %v2196, %v1981
  %v2222 = vsel %vm2213, %v2197, %v1983
  %v2223 = vsel %vm2213, %v2198, %v1985
  %v2224 = vsel %vm2213, %v2199, %v1987
  %v2225 = vsel %vm2213, %v2200, %v1989
  %v2226 = vsel %vm2213, %v2201, %v1991
  %v2227 = vsel %vm2213, %v2202, %v1993
  %v2228 = vsel %vm2213, %v2203, %v1995
  %v2229 = vsel %vm2213, %v2204, %v1997
  %v2230 = vsel %vm2213, %v2205, %v1999
  %v2231 = vsel %vm2213, %v2206, %v2001
  %v2232 = vsel %vm2213, %v2207, %v2003
  %v2233 = vsel %vm2213, %v2208, %v2005
  %v2234 = vsel %vm2213, %v2209, %v2007
  %v2235 = vsel %vm2213, %v2210, %v2009
  %v2236 = vsel %vm2213, %v2211, %v2011
  %v2237 = vsel %vm2213, %v2212, %v2013
  %v2262 = vcombine.high %v2214, %v2214
  %v2263 = vcombine.high %v2216, %v2216
  %v2264 = vcombine.high %v2218, %v2218
  %v2265 = vcombine.high %v2220, %v2220
  %v2266 = vcombine.high %v2222, %v2222
  %v2267 = vcombine.high %v2224, %v2224
  %v2268 = vcombine.high %v2226, %v2226
  %v2269 = vcombine.high %v2228, %v2228
  %v2270 = vcombine.high %v2230, %v2230
  %v2271 = vcombine.high %v2232, %v2232
  %v2272 = vcombine.high %v2234, %v2234
  %v2273 = vcombine.high %v2236, %v2236
  %v2274 = vcombine.low %v2214, %v2262
  %v2275 = vcombine.low %v2215, %v2216
  %v2276 = vcombine.low %v2263, %v2217
  %v2277 = vcombine.low %v2218, %v2264
  %v2278 = vcombine.low %v2219, %v2220
  %v2279 = vcombine.low %v2265, %v2221
  %v2280 = vcombine.low %v2222, %v2266
  %v2281 = vcombine.low %v2223, %v2224
  %v2282 = vcombine.low %v2267, %v2225
  %v2283 = vcombine.low %v2226, %v2268
  %v2284 = vcombine.low %v2227, %v2228
  %v2285 = vcombine.low %v2269, %v2229
  %v2286 = vcombine.low %v2230, %v2270
  %v2287 = vcombine.low %v2231, %v2232
  %v2288 = vcombine.low %v2271, %v2233
  %v2289 = vcombine.low %v2234, %v2272
  %v2290 = vcombine.low %v2235, %v2236
  %v2291 = vcombine.low %v2273, %v2237
  %vm2292 = vcmask 588800
  %v2293 = vsel %vm2292, %v2274, 0
  %v2295 = vsel %vm2292, %v2275, 0
  %v2297 = vsel %vm2292, %v2276, 0
  %v2299 = vsel %vm2292, %v2277, 0
  %v2301 = vsel %vm2292, %v2278, 0
  %v2303 = vsel %vm2292, %v2279, 0
  %v2305 = vsel %vm2292, %v2280, 0
  %v2307 = vsel %vm2292, %v2281, 0
  %v2309 = vsel %vm2292, %v2282, 0
  %v2311 = vsel %vm2292, %v2283, 0
  %v2313 = vsel %vm2292, %v2284, 0
  %v2315 = vsel %vm2292, %v2285, 0
  %v2317 = vsel %vm2292, %v2286, 0
  %v2319 = vsel %vm2292, %v2287, 0
  %v2321 = vsel %vm2292, %v2288, 0
  %v2323 = vsel %vm2292, %v2289, 0
  %v2325 = vsel %vm2292, %v2290, 0
  %v2327 = vsel %vm2292, %v2291, 0
  %2329 = vmatprep.subr.mxu0 0.0
  %2330 = vmatpush1.msra.mxu0 0.0
  %2331 = vmatprep.subr.mxu0 0.0
  %2332 = vmatpush1.msra.mxu0 0.0
  %2333 = vmatprep.subr.mxu0 0.0
  %2334 = vmatpush1.msra.mxu0 0.0
  %2335 = vmatprep.subr.mxu0 0.0
  %2336 = vmatpush1.msra.mxu0 0.0
  %2337 = vmatprep.subr.mxu0 0.0
  %2338 = vmatpush1.msra.mxu0 0.0
  %2339 = vmatprep.subr.mxu0 0.0
  %2340 = vmatpush1.msra.mxu0 0.0
  %2341 = vmatprep.subr.mxu0 0.0
  %2342 = vmatpush1.msra.mxu0 0.0
  %2343 = vmatprep.subr.mxu0 0.0
  %2344 = vmatpush1.msra.mxu0 %v1349
  %2345 = vmatprep.subr.mxu0 0.0
  %2346 = vmatpush1.msra.mxu0 %v1348
  %2347 = vmatprep.subr.mxu0 0.0
  %2348 = vmatpush1.msra.mxu0 %v1347
  %2349 = vmatprep.subr.mxu0 0.0
  %2350 = vmatpush1.msra.mxu0 %v1346
  %2351 = vmatprep.subr.mxu0 0.0
  %2352 = vmatpush1.msra.mxu0 %v1345
  %2353 = vmatprep.subr.mxu0 0.0
  %2354 = vmatpush1.msra.mxu0 %v1344
  %2355 = vmatprep.subr.mxu0 0.0
  %2356 = vmatpush1.msra.mxu0 %v1343
  %2357 = vmatprep.subr.mxu0 0.0
  %2358 = vmatpush1.msra.mxu0 %v1342
  %2359 = vmatprep.subr.mxu0 0.0
  %2360 = vmatpush1.msra.mxu0 %v1341
  %2361 = vmatprep.subr.mxu0 0.0
  %2362 = vmatpush2.msra.mxu0 0.0
  %2363 = vmatprep.subr.mxu0 0.0
  %2364 = vmatpush2.msra.mxu0 0.0
  %2365 = vmatprep.subr.mxu0 0.0
  %2366 = vmatpush2.msra.mxu0 0.0
  %2367 = vmatprep.subr.mxu0 0.0
  %2368 = vmatpush2.msra.mxu0 0.0
  %2369 = vmatprep.subr.mxu0 0.0
  %2370 = vmatpush2.msra.mxu0 0.0
  %2371 = vmatprep.subr.mxu0 0.0
  %2372 = vmatpush2.msra.mxu0 0.0
  %2373 = vmatprep.subr.mxu0 0.0
  %2374 = vmatpush2.msra.mxu0 0.0
  %2375 = vmatprep.subr.mxu0 0.0
  %2376 = vmatpush2.msra.mxu0 0.0
  %2377 = vmatprep.subr.mxu0 0.0
  %2378 = vmatpush2.msra.mxu0 0.0
  %2379 = vmatprep.subr.mxu0 0.0
  %2380 = vmatpush2.msra.mxu0 0.0
  %2381 = vmatprep.subr.mxu0 0.0
  %2382 = vmatpush2.msra.mxu0 0.0
  %2383 = vmatprep.subr.mxu0 0.0
  %2384 = vmatpush2.msra.mxu0 0.0
  %2385 = vmatprep.subr.mxu0 0.0
  %2386 = vmatpush2.msra.mxu0 0.0
  %2387 = vmatprep.subr.mxu0 0.0
  %2388 = vmatpush2.msra.mxu0 0.0
  %2389 = vmatprep.subr.mxu0 0.0
  %2390 = vmatpush2.msra.mxu0 0.0
  %2391 = vmatprep.subr.mxu0 0.0
  %2392 = vmatpush2.msra.mxu0 0.0
  %2393 = vmatprep.mubr.f32.mxu0 0.0
  %2394 = vmatmul.mubr.f32.gmra.mxu0 %v2293
  %v2395 = vpop.f32.mrf.mxu0
  %v2396 = vadd.f32 0.0, %v2395
  %v2397 = vpop.f32.mrf.mxu0
  %2398 = vmatprep.mubr.f32.mxu0 0.0
  %2399 = vmatmul.mubr.f32.gmra.mxu0 %v2295
  %v2400 = vpop.f32.mrf.mxu0
  %v2401 = vadd.f32 0.0, %v2400
  %v2402 = vpop.f32.mrf.mxu0
  %2403 = vmatprep.mubr.f32.mxu0 0.0
  %2404 = vmatmul.mubr.f32.gmra.mxu0 %v2297
  %v2405 = vpop.f32.mrf.mxu0
  %v2406 = vpop.f32.mrf.mxu0
  %2407 = vmatprep.mubr.f32.mxu0 0.0
  %2408 = vmatmul.mubr.f32.gmra.mxu0 %v2299
  %v2409 = vpop.f32.mrf.mxu0
  %v2410 = vadd.f32 0.0, %v2409
  %v2411 = vpop.f32.mrf.mxu0
  %2412 = vmatprep.mubr.f32.mxu0 0.0
  %2413 = vmatmul.mubr.f32.gmra.mxu0 %v2301
  %v2414 = vpop.f32.mrf.mxu0
  %v2415 = vadd.f32 0.0, %v2414
  %v2416 = vpop.f32.mrf.mxu0
  %2417 = vmatprep.mubr.f32.mxu0 0.0
  %2418 = vmatmul.mubr.f32.gmra.mxu0 %v2303
  %v2419 = vpop.f32.mrf.mxu0
  %v2420 = vpop.f32.mrf.mxu0
  %2421 = vmatprep.mubr.f32.mxu0 0.0
  %2422 = vmatmul.mubr.f32.gmra.mxu0 %v2305
  %v2423 = vpop.f32.mrf.mxu0
  %v2424 = vadd.f32 0.0, %v2423
  %v2425 = vpop.f32.mrf.mxu0
  %2426 = vmatprep.mubr.f32.mxu0 0.0
  %2427 = vmatmul.mubr.f32.gmra.mxu0 %v2307
  %v2428 = vpop.f32.mrf.mxu0
  %v2429 = vadd.f32 0.0, %v2428
  %v2430 = vpop.f32.mrf.mxu0
  %2431 = vmatprep.mubr.f32.mxu0 0.0
  %2432 = vmatmul.mubr.f32.gmra.mxu0 %v2309
  %v2433 = vpop.f32.mrf.mxu0
  %v2434 = vpop.f32.mrf.mxu0
  %2435 = vmatprep.mubr.f32.mxu0 0.0
  %2436 = vmatmul.mubr.f32.gmra.mxu0 %v2311
  %v2437 = vpop.f32.mrf.mxu0
  %v2438 = vadd.f32 0.0, %v2437
  %v2439 = vpop.f32.mrf.mxu0
  %2440 = vmatprep.mubr.f32.mxu0 0.0
  %2441 = vmatmul.mubr.f32.gmra.mxu0 %v2313
  %v2442 = vpop.f32.mrf.mxu0
  %v2443 = vadd.f32 0.0, %v2442
  %v2444 = vpop.f32.mrf.mxu0
  %2445 = vmatprep.mubr.f32.mxu0 0.0
  %2446 = vmatmul.mubr.f32.gmra.mxu0 %v2315
  %v2447 = vpop.f32.mrf.mxu0
  %v2448 = vpop.f32.mrf.mxu0
  %2449 = vmatprep.mubr.f32.mxu0 0.0
  %2450 = vmatmul.mubr.f32.gmra.mxu0 %v2317
  %v2451 = vpop.f32.mrf.mxu0
  %v2452 = vadd.f32 0.0, %v2451
  %v2453 = vpop.f32.mrf.mxu0
  %2454 = vmatprep.mubr.f32.mxu0 0.0
  %2455 = vmatmul.mubr.f32.gmra.mxu0 %v2319
  %v2456 = vpop.f32.mrf.mxu0
  %v2457 = vadd.f32 0.0, %v2456
  %v2458 = vpop.f32.mrf.mxu0
  %2459 = vmatprep.mubr.f32.mxu0 0.0
  %2460 = vmatmul.mubr.f32.gmra.mxu0 %v2321
  %v2461 = vpop.f32.mrf.mxu0
  %v2462 = vpop.f32.mrf.mxu0
  %2463 = vmatprep.mubr.f32.mxu0 0.0
  %2464 = vmatmul.mubr.f32.gmra.mxu0 %v2323
  %v2465 = vpop.f32.mrf.mxu0
  %v2466 = vadd.f32 0.0, %v2465
  %v2467 = vpop.f32.mrf.mxu0
  %2468 = vmatprep.mubr.f32.mxu0 0.0
  %2469 = vmatmul.mubr.f32.gmra.mxu0 %v2325
  %v2470 = vpop.f32.mrf.mxu0
  %v2471 = vadd.f32 0.0, %v2470
  %v2472 = vpop.f32.mrf.mxu0
  %2473 = vmatprep.mubr.f32.mxu0 0.0
  %2474 = vmatmul.mubr.f32.gmra.mxu0 %v2327
  %v2475 = vpop.f32.mrf.mxu0
  %v2476 = vpop.f32.mrf.mxu0
  %2477 = vdwg.mxu0
  %v2490 = vcombine.high %v2396, %v2396
  %v2491 = vcombine.high %v2410, %v2410
  %v2492 = vcombine.high %v2424, %v2424
  %v2493 = vcombine.high %v2438, %v2438
  %v2494 = vcombine.high %v2452, %v2452
  %v2495 = vcombine.high %v2466, %v2466
  %v2497 = vunpack.c.l.s4 1983009808
  %v2498 = vunpack.c.0.s8 %v2497
  %v2499 = vlaneseq
  %v2500 = vshrl.u32 %v2499, 7
  %v2501 = vsub.s32 %v2498, %v2500
  %v2502 = vrot.slane %v2396, %v2501
  %v2503 = vcombine.high %v2502, %v2502
  %v2505 = vunpack.c.l.s4 1983009808
  %v2506 = vunpack.c.0.s8 %v2505
  %v2507 = vlaneseq
  %v2508 = vshrl.u32 %v2507, 7
  %v2509 = vsub.s32 %v2506, %v2508
  %v2510 = vrot.slane %v2490, %v2509
  %v2511 = vcombine.high %v2510, %v2510
  %v2513 = vunpack.c.l.s4 1983009808
  %v2514 = vunpack.c.0.s8 %v2513
  %v2515 = vlaneseq
  %v2516 = vshrl.u32 %v2515, 7
  %v2517 = vsub.s32 %v2514, %v2516
  %v2518 = vrot.slane %v2401, %v2517
  %v2519 = vcombine.high %v2518, %v2518
  %v2521 = vunpack.c.l.s4 1983009808
  %v2522 = vunpack.c.0.s8 %v2521
  %v2523 = vlaneseq
  %v2524 = vshrl.u32 %v2523, 7
  %v2525 = vsub.s32 %v2522, %v2524
  %v2526 = vrot.slane %v2410, %v2525
  %v2527 = vcombine.high %v2526, %v2526
  %v2529 = vunpack.c.l.s4 1983009808
  %v2530 = vunpack.c.0.s8 %v2529
  %v2531 = vlaneseq
  %v2532 = vshrl.u32 %v2531, 7
  %v2533 = vsub.s32 %v2530, %v2532
  %v2534 = vrot.slane %v2491, %v2533
  %v2535 = vcombine.high %v2534, %v2534
  %v2537 = vunpack.c.l.s4 1983009808
  %v2538 = vunpack.c.0.s8 %v2537
  %v2539 = vlaneseq
  %v2540 = vshrl.u32 %v2539, 7
  %v2541 = vsub.s32 %v2538, %v2540
  %v2542 = vrot.slane %v2415, %v2541
  %v2543 = vcombine.high %v2542, %v2542
  %v2545 = vunpack.c.l.s4 1983009808
  %v2546 = vunpack.c.0.s8 %v2545
  %v2547 = vlaneseq
  %v2548 = vshrl.u32 %v2547, 7
  %v2549 = vsub.s32 %v2546, %v2548
  %v2550 = vrot.slane %v2424, %v2549
  %v2551 = vcombine.high %v2550, %v2550
  %v2553 = vunpack.c.l.s4 1983009808
  %v2554 = vunpack.c.0.s8 %v2553
  %v2555 = vlaneseq
  %v2556 = vshrl.u32 %v2555, 7
  %v2557 = vsub.s32 %v2554, %v2556
  %v2558 = vrot.slane %v2492, %v2557
  %v2559 = vcombine.high %v2558, %v2558
  %v2561 = vunpack.c.l.s4 1983009808
  %v2562 = vunpack.c.0.s8 %v2561
  %v2563 = vlaneseq
  %v2564 = vshrl.u32 %v2563, 7
  %v2565 = vsub.s32 %v2562, %v2564
  %v2566 = vrot.slane %v2429, %v2565
  %v2567 = vcombine.high %v2566, %v2566
  %v2569 = vunpack.c.l.s4 1983009808
  %v2570 = vunpack.c.0.s8 %v2569
  %v2571 = vlaneseq
  %v2572 = vshrl.u32 %v2571, 7
  %v2573 = vsub.s32 %v2570, %v2572
  %v2574 = vrot.slane %v2438, %v2573
  %v2575 = vcombine.high %v2574, %v2574
  %v2577 = vunpack.c.l.s4 1983009808
  %v2578 = vunpack.c.0.s8 %v2577
  %v2579 = vlaneseq
  %v2580 = vshrl.u32 %v2579, 7
  %v2581 = vsub.s32 %v2578, %v2580
  %v2582 = vrot.slane %v2493, %v2581
  %v2583 = vcombine.high %v2582, %v2582
  %v2585 = vunpack.c.l.s4 1983009808
  %v2586 = vunpack.c.0.s8 %v2585
  %v2587 = vlaneseq
  %v2588 = vshrl.u32 %v2587, 7
  %v2589 = vsub.s32 %v2586, %v2588
  %v2590 = vrot.slane %v2443, %v2589
  %v2591 = vcombine.high %v2590, %v2590
  %v2593 = vunpack.c.l.s4 1983009808
  %v2594 = vunpack.c.0.s8 %v2593
  %v2595 = vlaneseq
  %v2596 = vshrl.u32 %v2595, 7
  %v2597 = vsub.s32 %v2594, %v2596
  %v2598 = vrot.slane %v2452, %v2597
  %v2599 = vcombine.high %v2598, %v2598
  %v2601 = vunpack.c.l.s4 1983009808
  %v2602 = vunpack.c.0.s8 %v2601
  %v2603 = vlaneseq
  %v2604 = vshrl.u32 %v2603, 7
  %v2605 = vsub.s32 %v2602, %v2604
  %v2606 = vrot.slane %v2494, %v2605
  %v2607 = vcombine.high %v2606, %v2606
  %v2609 = vunpack.c.l.s4 1983009808
  %v2610 = vunpack.c.0.s8 %v2609
  %v2611 = vlaneseq
  %v2612 = vshrl.u32 %v2611, 7
  %v2613 = vsub.s32 %v2610, %v2612
  %v2614 = vrot.slane %v2457, %v2613
  %v2615 = vcombine.high %v2614, %v2614
  %v2617 = vunpack.c.l.s4 1983009808
  %v2618 = vunpack.c.0.s8 %v2617
  %v2619 = vlaneseq
  %v2620 = vshrl.u32 %v2619, 7
  %v2621 = vsub.s32 %v2618, %v2620
  %v2622 = vrot.slane %v2466, %v2621
  %v2623 = vcombine.high %v2622, %v2622
  %v2625 = vunpack.c.l.s4 1983009808
  %v2626 = vunpack.c.0.s8 %v2625
  %v2627 = vlaneseq
  %v2628 = vshrl.u32 %v2627, 7
  %v2629 = vsub.s32 %v2626, %v2628
  %v2630 = vrot.slane %v2495, %v2629
  %v2631 = vcombine.high %v2630, %v2630
  %v2633 = vunpack.c.l.s4 1983009808
  %v2634 = vunpack.c.0.s8 %v2633
  %v2635 = vlaneseq
  %v2636 = vshrl.u32 %v2635, 7
  %v2637 = vsub.s32 %v2634, %v2636
  %v2638 = vrot.slane %v2471, %v2637
  %v2639 = vcombine.high %v2638, %v2638
  %v2676 = vld [vmem:[%s3] sm:$0x1]
  %v2678 = vlaneseq
  %v2679 = vshrl.u32 %v2678, 7
  %v2680 = vsub.s32 0, %v2679
  %v2681 = vrot.slane %v2676, %v2680
  %v2682 = vcombine.high %v2681, %v2681
  %v2684 = vunpack.c.l.s4 1983009808
  %v2685 = vunpack.c.0.s8 %v2684
  %v2686 = vlaneseq
  %v2687 = vshrl.u32 %v2686, 7
  %v2688 = vsub.s32 %v2685, %v2687
  %v2689 = vrot.slane %v2681, %v2688
  %v2691 = vunpack.c.l.s4 1983009808
  %v2692 = vunpack.c.0.s8 %v2691
  %v2693 = vlaneseq
  %v2694 = vshrl.u32 %v2693, 7
  %v2695 = vsub.s32 %v2692, %v2694
  %v2696 = vrot.slane %v2682, %v2695
  %v2697 = vcombine.high %v2689, %v2689
  %v2698 = vrot.slane %v2689, 1
  %v2699 = vrot.slane %v2697, 1
  %v2700 = vrot.slane %v2696, 1
  %v2707 = vmul.f32 %v2502, %v2689
  %v2708 = vmul.f32 %v2503, %v2698
  %v2709 = vmul.f32 %v2510, %v2697
  %v2710 = vmul.f32 %v2511, %v2699
  %v2711 = vmul.f32 %v2518, %v2696
  %v2712 = vmul.f32 %v2519, %v2700
  %v2713 = vmul.f32 %v2526, %v2689
  %v2714 = vmul.f32 %v2527, %v2698
  %v2715 = vmul.f32 %v2534, %v2697
  %v2716 = vmul.f32 %v2535, %v2699
  %v2717 = vmul.f32 %v2542, %v2696
  %v2718 = vmul.f32 %v2543, %v2700
  %v2719 = vmul.f32 %v2550, %v2689
  %v2720 = vmul.f32 %v2551, %v2698
  %v2721 = vmul.f32 %v2558, %v2697
  %v2722 = vmul.f32 %v2559, %v2699
  %v2723 = vmul.f32 %v2566, %v2696
  %v2724 = vmul.f32 %v2567, %v2700
  %v2725 = vmul.f32 %v2574, %v2689
  %v2726 = vmul.f32 %v2575, %v2698
  %v2727 = vmul.f32 %v2582, %v2697
  %v2728 = vmul.f32 %v2583, %v2699
  %v2729 = vmul.f32 %v2590, %v2696
  %v2730 = vmul.f32 %v2591, %v2700
  %v2731 = vmul.f32 %v2598, %v2689
  %v2732 = vmul.f32 %v2599, %v2698
  %v2733 = vmul.f32 %v2606, %v2697
  %v2734 = vmul.f32 %v2607, %v2699
  %v2735 = vmul.f32 %v2614, %v2696
  %v2736 = vmul.f32 %v2615, %v2700
  %v2737 = vmul.f32 %v2622, %v2689
  %v2738 = vmul.f32 %v2623, %v2698
  %v2739 = vmul.f32 %v2630, %v2697
  %v2740 = vmul.f32 %v2631, %v2699
  %v2741 = vmul.f32 %v2638, %v2696
  %v2742 = vmul.f32 %v2639, %v2700
  %v2779 = vlaneseq
  %v2780 = vshrl.u32 %v2779, 7
  %v2781 = vsub.s32 0, %v2780
  %v2782 = vrot.slane %v2707, %v2781
  %v2783 = vlaneseq
  %v2784 = vshrl.u32 %v2783, 7
  %v2785 = vsub.s32 0, %v2784
  %v2786 = vrot.slane %v2708, %v2785
  %v2787 = vlaneseq
  %v2788 = vshrl.u32 %v2787, 7
  %v2789 = vsub.s32 0, %v2788
  %v2790 = vrot.slane %v2709, %v2789
  %v2791 = vlaneseq
  %v2792 = vshrl.u32 %v2791, 7
  %v2793 = vsub.s32 0, %v2792
  %v2794 = vrot.slane %v2710, %v2793
  %v2795 = vlaneseq
  %v2796 = vshrl.u32 %v2795, 7
  %v2797 = vsub.s32 0, %v2796
  %v2798 = vrot.slane %v2711, %v2797
  %v2799 = vlaneseq
  %v2800 = vshrl.u32 %v2799, 7
  %v2801 = vsub.s32 0, %v2800
  %v2802 = vrot.slane %v2712, %v2801
  %v2803 = vlaneseq
  %v2804 = vshrl.u32 %v2803, 7
  %v2805 = vsub.s32 0, %v2804
  %v2806 = vrot.slane %v2713, %v2805
  %v2807 = vlaneseq
  %v2808 = vshrl.u32 %v2807, 7
  %v2809 = vsub.s32 0, %v2808
  %v2810 = vrot.slane %v2714, %v2809
  %v2811 = vlaneseq
  %v2812 = vshrl.u32 %v2811, 7
  %v2813 = vsub.s32 0, %v2812
  %v2814 = vrot.slane %v2715, %v2813
  %v2815 = vlaneseq
  %v2816 = vshrl.u32 %v2815, 7
  %v2817 = vsub.s32 0, %v2816
  %v2818 = vrot.slane %v2716, %v2817
  %v2819 = vlaneseq
  %v2820 = vshrl.u32 %v2819, 7
  %v2821 = vsub.s32 0, %v2820
  %v2822 = vrot.slane %v2717, %v2821
  %v2823 = vlaneseq
  %v2824 = vshrl.u32 %v2823, 7
  %v2825 = vsub.s32 0, %v2824
  %v2826 = vrot.slane %v2718, %v2825
  %v2827 = vlaneseq
  %v2828 = vshrl.u32 %v2827, 7
  %v2829 = vsub.s32 0, %v2828
  %v2830 = vrot.slane %v2719, %v2829
  %v2831 = vlaneseq
  %v2832 = vshrl.u32 %v2831, 7
  %v2833 = vsub.s32 0, %v2832
  %v2834 = vrot.slane %v2720, %v2833
  %v2835 = vlaneseq
  %v2836 = vshrl.u32 %v2835, 7
  %v2837 = vsub.s32 0, %v2836
  %v2838 = vrot.slane %v2721, %v2837
  %v2839 = vlaneseq
  %v2840 = vshrl.u32 %v2839, 7
  %v2841 = vsub.s32 0, %v2840
  %v2842 = vrot.slane %v2722, %v2841
  %v2843 = vlaneseq
  %v2844 = vshrl.u32 %v2843, 7
  %v2845 = vsub.s32 0, %v2844
  %v2846 = vrot.slane %v2723, %v2845
  %v2847 = vlaneseq
  %v2848 = vshrl.u32 %v2847, 7
  %v2849 = vsub.s32 0, %v2848
  %v2850 = vrot.slane %v2724, %v2849
  %v2851 = vlaneseq
  %v2852 = vshrl.u32 %v2851, 7
  %v2853 = vsub.s32 0, %v2852
  %v2854 = vrot.slane %v2725, %v2853
  %v2855 = vlaneseq
  %v2856 = vshrl.u32 %v2855, 7
  %v2857 = vsub.s32 0, %v2856
  %v2858 = vrot.slane %v2726, %v2857
  %v2859 = vlaneseq
  %v2860 = vshrl.u32 %v2859, 7
  %v2861 = vsub.s32 0, %v2860
  %v2862 = vrot.slane %v2727, %v2861
  %v2863 = vlaneseq
  %v2864 = vshrl.u32 %v2863, 7
  %v2865 = vsub.s32 0, %v2864
  %v2866 = vrot.slane %v2728, %v2865
  %v2867 = vlaneseq
  %v2868 = vshrl.u32 %v2867, 7
  %v2869 = vsub.s32 0, %v2868
  %v2870 = vrot.slane %v2729, %v2869
  %v2871 = vlaneseq
  %v2872 = vshrl.u32 %v2871, 7
  %v2873 = vsub.s32 0, %v2872
  %v2874 = vrot.slane %v2730, %v2873
  %v2875 = vlaneseq
  %v2876 = vshrl.u32 %v2875, 7
  %v2877 = vsub.s32 0, %v2876
  %v2878 = vrot.slane %v2731, %v2877
  %v2879 = vlaneseq
  %v2880 = vshrl.u32 %v2879, 7
  %v2881 = vsub.s32 0, %v2880
  %v2882 = vrot.slane %v2732, %v2881
  %v2883 = vlaneseq
  %v2884 = vshrl.u32 %v2883, 7
  %v2885 = vsub.s32 0, %v2884
  %v2886 = vrot.slane %v2733, %v2885
  %v2887 = vlaneseq
  %v2888 = vshrl.u32 %v2887, 7
  %v2889 = vsub.s32 0, %v2888
  %v2890 = vrot.slane %v2734, %v2889
  %v2891 = vlaneseq
  %v2892 = vshrl.u32 %v2891, 7
  %v2893 = vsub.s32 0, %v2892
  %v2894 = vrot.slane %v2735, %v2893
  %v2895 = vlaneseq
  %v2896 = vshrl.u32 %v2895, 7
  %v2897 = vsub.s32 0, %v2896
  %v2898 = vrot.slane %v2736, %v2897
  %v2899 = vlaneseq
  %v2900 = vshrl.u32 %v2899, 7
  %v2901 = vsub.s32 0, %v2900
  %v2902 = vrot.slane %v2737, %v2901
  %v2903 = vlaneseq
  %v2904 = vshrl.u32 %v2903, 7
  %v2905 = vsub.s32 0, %v2904
  %v2906 = vrot.slane %v2738, %v2905
  %v2907 = vlaneseq
  %v2908 = vshrl.u32 %v2907, 7
  %v2909 = vsub.s32 0, %v2908
  %v2910 = vrot.slane %v2739, %v2909
  %v2911 = vlaneseq
  %v2912 = vshrl.u32 %v2911, 7
  %v2913 = vsub.s32 0, %v2912
  %v2914 = vrot.slane %v2740, %v2913
  %v2915 = vlaneseq
  %v2916 = vshrl.u32 %v2915, 7
  %v2917 = vsub.s32 0, %v2916
  %v2918 = vrot.slane %v2741, %v2917
  %v2919 = vlaneseq
  %v2920 = vshrl.u32 %v2919, 7
  %v2921 = vsub.s32 0, %v2920
  %v2922 = vrot.slane %v2742, %v2921
  %vm2923 = vcmask 1041409
  %v2924 = vsel %vm2923, %v2786, %v2782
  %vm2925 = vcmask 1042434
  %v2926 = vsel %vm2925, %v2790, %v2924
  %vm2927 = vcmask 1043459
  %v2928 = vsel %vm2927, %v2794, %v2926
  %vm2929 = vcmask 1044484
  %v2930 = vsel %vm2929, %v2798, %v2928
  %vm2931 = vcmask 1045509
  %v2932 = vsel %vm2931, %v2802, %v2930
  %v2933 = vsel %vm2923, %v2810, %v2806
  %v2934 = vsel %vm2925, %v2814, %v2933
  %v2935 = vsel %vm2927, %v2818, %v2934
  %v2936 = vsel %vm2929, %v2822, %v2935
  %v2937 = vsel %vm2931, %v2826, %v2936
  %v2938 = vsel %vm2923, %v2834, %v2830
  %v2939 = vsel %vm2925, %v2838, %v2938
  %v2940 = vsel %vm2927, %v2842, %v2939
  %v2941 = vsel %vm2929, %v2846, %v2940
  %v2942 = vsel %vm2931, %v2850, %v2941
  %v2943 = vsel %vm2923, %v2858, %v2854
  %v2944 = vsel %vm2925, %v2862, %v2943
  %v2945 = vsel %vm2927, %v2866, %v2944
  %v2946 = vsel %vm2929, %v2870, %v2945
  %v2947 = vsel %vm2931, %v2874, %v2946
  %v2948 = vsel %vm2923, %v2882, %v2878
  %v2949 = vsel %vm2925, %v2886, %v2948
  %v2950 = vsel %vm2927, %v2890, %v2949
  %v2951 = vsel %vm2929, %v2894, %v2950
  %v2952 = vsel %vm2931, %v2898, %v2951
  %v2953 = vsel %vm2923, %v2906, %v2902
  %v2954 = vsel %vm2925, %v2910, %v2953
  %v2955 = vsel %vm2927, %v2914, %v2954
  %v2956 = vsel %vm2929, %v2918, %v2955
  %v2957 = vsel %vm2931, %v2922, %v2956
  %vm2964 = vcmask 62464
  %v2965 = vsel %vm2964, %v2932, 0.0
  %2966 = vadd.xlane.f32.xlu0 %v2965
  %v2967 = vpop.xlane.xlu0 %2966
  %v2968 = vsel %vm2964, %v2937, 0.0
  %2969 = vadd.xlane.f32.xlu0 %v2968
  %v2970 = vpop.xlane.xlu0 %2969
  %v2971 = vsel %vm2964, %v2942, 0.0
  %2972 = vadd.xlane.f32.xlu0 %v2971
  %v2973 = vpop.xlane.xlu0 %2972
  %v2974 = vsel %vm2964, %v2947, 0.0
  %2975 = vadd.xlane.f32.xlu0 %v2974
  %v2976 = vpop.xlane.xlu0 %2975
  %v2977 = vsel %vm2964, %v2952, 0.0
  %2978 = vadd.xlane.f32.xlu0 %v2977
  %v2979 = vpop.xlane.xlu0 %2978
  %v2980 = vsel %vm2964, %v2957, 0.0
  %2981 = vadd.xlane.f32.xlu0 %v2980
  %v2982 = vpop.xlane.xlu0 %2981
  %v2989 = vlaneseq
  %v2990 = vand.u32 %v2989, 127
  %v2991 = vlaneseq
  %v2992 = vshrl.u32 %v2991, 7
  %v2993 = vsub.s32 %v2990, %v2992
  %v2994 = vrot.slane %v2967, %v2993
  %v2995 = vlaneseq
  %v2996 = vshrl.u32 %v2995, 7
  %v2997 = vsub.s32 %v2990, %v2996
  %v2998 = vrot.slane %v2970, %v2997
  %v2999 = vlaneseq
  %v3000 = vshrl.u32 %v2999, 7
  %v3001 = vsub.s32 %v2990, %v3000
  %v3002 = vrot.slane %v2973, %v3001
  %v3003 = vlaneseq
  %v3004 = vshrl.u32 %v3003, 7
  %v3005 = vsub.s32 %v2990, %v3004
  %v3006 = vrot.slane %v2976, %v3005
  %v3007 = vlaneseq
  %v3008 = vshrl.u32 %v3007, 7
  %v3009 = vsub.s32 %v2990, %v3008
  %v3010 = vrot.slane %v2979, %v3009
  %v3011 = vlaneseq
  %v3012 = vshrl.u32 %v3011, 7
  %v3013 = vsub.s32 %v2990, %v3012
  %v3014 = vrot.slane %v2982, %v3013
  %v3015 = vsel %vm2923, %v2998, %v2994
  %v3016 = vsel %vm2925, %v3002, %v3015
  %v3017 = vsel %vm2927, %v3006, %v3016
  %v3018 = vsel %vm2929, %v3010, %v3017
  %v3019 = vsel %vm2931, %v3014, %v3018
  %vm3021 = vcmask 46080
  %3022 = vst.msk [vmem:[%s4] sm:$0x3f] %vm3021, %v3019
  // Predicated region
  $region18: #{_forward_impl.1} parent=0 // pred_check
    _
  $region19: #{_forward_impl.1} parent=0 // pred_check_branch
    %3024 = sbr.rel (0) target = $region21
  $region20: #{_forward_impl.1} parent=0 // pred_region
    _
  $region21: #{_forward_impl.1} parent=0 // pred_fallthru
    _
  // Predicated region
  $region22: #{_forward_impl.1} parent=0 // pred_check
    _
  $region23: #{_forward_impl.1} parent=0 // pred_check_branch
    %3026 = sbr.rel (0) target = $region25
  $region24: #{_forward_impl.1} parent=0 // pred_region
    _
  $region25: #{_forward_impl.1} parent=0 // pred_fallthru
    _

</llo_original>
